<compile_context>
chip_gen: v5e
topology: v5e:2x2
jax: 0.10.0
libtpu: 0.0.40
codegen_flags: <defaults>
</compile_context>

<pallas_src>
import jax
import jax.numpy as jnp
from jax import lax
from jax.experimental import pallas as pl
from jax.experimental.pallas import tpu as pltpu


# ----------------------------------------------------------------------------
# Fast path: tables resident in VMEM, one-hot MXU gather (no per-row DMAs).
# ----------------------------------------------------------------------------
def _mf_vmem_kernel(uidx_ref, iidx_ref, w_ref, h_ref, out_ref):
    """One batch tile with VMEM-resident tables.

    uidx_ref / iidx_ref : (TB, 1) int32 VMEM blocks (this tile's indices)
    w_ref               : (NU, K) f32 VMEM, constant block (resident)
    h_ref               : (NI, K) f32 VMEM, constant block (resident)
    out_ref             : (1, TB) f32 VMEM block (lane-dense output)
    """
    tb = uidx_ref.shape[0]
    nu = w_ref.shape[0]
    ni = h_ref.shape[0]

    # Vectorized gather: one_hot(idx) @ table on the MXU.  HIGHEST precision
    # makes the f32 row selection exact (one-hot entries are exactly 0/1).
    u_oh = (lax.broadcasted_iota(jnp.int32, (tb, nu), 1)
            == uidx_ref[...]).astype(jnp.float32)                  # (TB, NU)
    v_oh = (lax.broadcasted_iota(jnp.int32, (tb, ni), 1)
            == iidx_ref[...]).astype(jnp.float32)                  # (TB, NI)
    u_emb = jnp.dot(u_oh, w_ref[...],
                    preferred_element_type=jnp.float32,
                    precision=lax.Precision.HIGHEST)               # (TB, K)
    v_emb = jnp.dot(v_oh, h_ref[...],
                    preferred_element_type=jnp.float32,
                    precision=lax.Precision.HIGHEST)               # (TB, K)

    # VPU multiply, XLU reduce over K, EUP sigmoid; lane-dense store.
    s = jnp.sum(u_emb * v_emb, axis=1)                             # (TB,)
    out_ref[...] = jax.nn.sigmoid(s)[None, :]                      # (1, TB)


# ----------------------------------------------------------------------------
# Fallback path: HBM tables, per-row DMA gather, double-buffered + bulk waits.
# ----------------------------------------------------------------------------
def _mf_hbm_kernel(uidx_ref, iidx_ref, w_hbm, h_hbm, out_ref,
                   u_buf, v_buf, sems):
    """One batch tile with HBM-resident tables.

    uidx_ref / iidx_ref : (Bp,) int32 in SMEM (scalar prefetch)
    w_hbm / h_hbm       : (NU, K) / (NI, K) f32 raw HBM refs (pl.ANY)
    out_ref             : (1, TB) f32 VMEM block
    u_buf / v_buf       : (2, TB, K) f32 VMEM scratch (double-buffered gather)
    sems                : DMA semaphores, shape (2, 2) = (table, slot)
    """
    tb = u_buf.shape[1]
    t = pl.program_id(0)
    nt = pl.num_programs(0)
    slot = t % 2

    def issue_tile(tile, slot_):
        base = tile * tb

        def body(r, carry):
            u = uidx_ref[base + r]
            i = iidx_ref[base + r]
            pltpu.make_async_copy(
                w_hbm.at[pl.ds(u, 1)], u_buf.at[slot_, pl.ds(r, 1)],
                sems.at[0, slot_]).start()
            pltpu.make_async_copy(
                h_hbm.at[pl.ds(i, 1)], v_buf.at[slot_, pl.ds(r, 1)],
                sems.at[1, slot_]).start()
            return carry

        # Unrolled so scalar SMEM index loads co-issue with descriptor pushes.
        lax.fori_loop(0, tb, body, 0, unroll=8)

    # Prime the pipeline: on the first grid step gather this tile into slot 0.
    @pl.when(t == 0)
    def _():
        issue_tile(0, 0)

    # Prefetch the NEXT tile's rows into the other slot; these DMAs overlap
    # with this tile's wait + compute + output writeback.
    @pl.when(t + 1 < nt)
    def _():
        issue_tile(t + 1, 1 - slot)

    # One bulk wait per buffer: a descriptor whose dst is the entire (TB, K)
    # slot drains the semaphore for all TB row copies in a single wait.
    # (Padded batch rows also issue real copies of row 0, so the byte count
    # always matches; the extra outputs are sliced off in the wrapper.)
    pltpu.make_async_copy(u_buf.at[slot], u_buf.at[slot],
                          sems.at[0, slot]).wait()
    pltpu.make_async_copy(v_buf.at[slot], v_buf.at[slot],
                          sems.at[1, slot]).wait()

    s = jnp.sum(u_buf[slot] * v_buf[slot], axis=1)                 # (TB,)
    out_ref[...] = jax.nn.sigmoid(s)[None, :]                      # (1, TB)


# ----------------------------------------------------------------------------
# Wrapper
# ----------------------------------------------------------------------------
def _vmem_capacity_bytes():
    # Generation-aware physical VMEM (v5e/v6e: 128 MiB, v7x: 64 MiB per TC).
    try:
        return int(pltpu.get_tpu_info().vmem_capacity_bytes)
    except Exception:
        return 64 * 1024 * 1024   # conservative (v7x-sized) fallback


def mf_forward(x, W, H, *, tile_b=1024):
    """x: (B, 2) int index pairs; W: (num_users, K); H: (num_items, K).

    Returns sigmoid(sum(W[x[:,0]] * H[x[:,1]], axis=1)) of shape (B,) f32.
    """
    x = jnp.asarray(x)
    W = jnp.asarray(W, jnp.float32)
    H = jnp.asarray(H, jnp.float32)
    B = x.shape[0]
    num_users, K = W.shape
    num_items = H.shape[0]

    # Clamp (matches jnp gather behaviour; nn.Embedding would error on OOB).
    uidx = jnp.clip(x[:, 0].astype(jnp.int32), 0, num_users - 1)
    iidx = jnp.clip(x[:, 1].astype(jnp.int32), 0, num_items - 1)

    # VMEM budgeting: explicit so v7x's 64 MiB (and the 32 MiB default scoped
    # limit) never silently force the slow path or OOM.
    budget = int(_vmem_capacity_bytes() * 0.75)
    table_bytes = (num_users + num_items) * K * 4
    slack = 4 << 20                                # pipeliner / Mosaic scratch

    # Lane-aligned batch tile (multiple of 128 => unmasked (1, TB) output
    # stores), large by default to amortize per-grid-step overhead.
    tb = min(int(tile_b), pl.cdiv(B, 128) * 128)
    tb = max(128, (tb // 128) * 128)

    # Fast path iff the (double-buffered) resident tables plus the per-tile
    # one-hot gather intermediates fit the budget at the minimum 128-row tile.
    def _fast_bytes(t):
        return 2 * table_bytes + t * (num_users + num_items) * 4 + slack

    use_vmem_tables = _fast_bytes(128) <= budget
    if use_vmem_tables:
        while tb > 128 and _fast_bytes(tb) > budget:
            tb -= 128

    # Pad the batch to a whole number of tiles (pad rows use index 0; their
    # outputs are sliced off below).
    bp = pl.cdiv(B, tb) * tb
    if bp != B:
        pad = bp - B
        uidx = jnp.concatenate([uidx, jnp.zeros((pad,), jnp.int32)])
        iidx = jnp.concatenate([iidx, jnp.zeros((pad,), jnp.int32)])
    num_tiles = bp // tb

    if use_vmem_tables:
        # ---- Fast path: W / H resident in VMEM, zero per-row DMAs. ----
        grid_spec = pltpu.PrefetchScalarGridSpec(
            num_scalar_prefetch=0,
            grid=(num_tiles,),
            in_specs=[
                pl.BlockSpec((tb, 1), lambda t: (t, 0)),           # user idx
                pl.BlockSpec((tb, 1), lambda t: (t, 0)),           # item idx
                pl.BlockSpec((num_users, K), lambda t: (0, 0)),    # W resident
                pl.BlockSpec((num_items, K), lambda t: (0, 0)),    # H resident
            ],
            out_specs=pl.BlockSpec((1, tb), lambda t: (0, t)),
        )
        out = pl.pallas_call(
            _mf_vmem_kernel,
            out_shape=jax.ShapeDtypeStruct((1, bp), jnp.float32),
            grid_spec=grid_spec,
            compiler_params=pltpu.CompilerParams(
                # Batch-tile axis is fully independent -> shards across v7x's
                # two TensorCores whenever num_tiles >= 2.
                dimension_semantics=("parallel",),
                vmem_limit_bytes=budget),
        )(uidx[:, None], iidx[:, None], W, H)
    else:
        # ---- Fallback: HBM tables, double-buffered per-row DMA gather with
        # bulk semaphore waits.  Must stay "arbitrary": the cross-tile
        # prefetch relies on sequential grid order. ----
        grid_spec = pltpu.PrefetchScalarGridSpec(
            num_scalar_prefetch=2,                    # uidx, iidx -> SMEM
            grid=(num_tiles,),
            in_specs=[
                pl.BlockSpec(memory_space=pl.ANY),    # W stays in HBM
                pl.BlockSpec(memory_space=pl.ANY),    # H stays in HBM
            ],
            out_specs=pl.BlockSpec((1, tb), lambda t, u, i: (0, t)),
            scratch_shapes=[
                pltpu.VMEM((2, tb, K), jnp.float32),
                pltpu.VMEM((2, tb, K), jnp.float32),
                pltpu.SemaphoreType.DMA((2, 2)),
            ],
        )
        out = pl.pallas_call(
            _mf_hbm_kernel,
            out_shape=jax.ShapeDtypeStruct((1, bp), jnp.float32),
            grid_spec=grid_spec,
            compiler_params=pltpu.CompilerParams(
                dimension_semantics=("arbitrary",),
                vmem_limit_bytes=budget),
        )(uidx, iidx, W, H)

    return out[0, :B]


def mf_forward_ref(x, W, H):
    # Pure-JAX reference (same math, no Pallas).
    u_emb = W[x[:, 0]]
    v_emb = H[x[:, 1]]
    return jax.nn.sigmoid(jnp.sum(u_emb * v_emb, axis=1))


if __name__ == "__main__":
    num_users = 32
    num_items = 48
    embedding_k = 4
    batch = 8

    key = jax.random.PRNGKey(0)
    kw, kh, ku, ki = jax.random.split(key, 4)

    # nn.Embedding default init: N(0, 1)
    W = jax.random.normal(kw, (num_users, embedding_k), dtype=jnp.float32)
    H = jax.random.normal(kh, (num_items, embedding_k), dtype=jnp.float32)

    user_idx = jax.random.randint(ku, (batch,), 0, num_users, dtype=jnp.int32)
    item_idx = jax.random.randint(ki, (batch,), 0, num_items, dtype=jnp.int32)
    x = jnp.stack([user_idx, item_idx], axis=1)   # (B, 2)

    out = jax.block_until_ready(mf_forward(x, W, H))
    ref = mf_forward_ref(x, W, H)

    assert out.shape == (batch,)
    assert jnp.allclose(out, ref, atol=1e-4, rtol=1e-4), (out, ref)

    print("KERNEL_OK")
</pallas_src>

<mosaic_0001>
module attributes {stable_mosaic.version = 11 : i64} {
  func.func @_mf_vmem_kernel(%arg0: i32, %arg1: memref<128x1xi32, #tpu.memory_space<vmem>>, %arg2: memref<128x1xi32, #tpu.memory_space<vmem>>, %arg3: memref<32x4xf32, #tpu.memory_space<vmem>>, %arg4: memref<48x4xf32, #tpu.memory_space<vmem>>, %arg5: memref<1x128xf32, #tpu.memory_space<vmem>>) attributes {dimension_semantics = [#tpu.dimension_semantics<parallel>], iteration_bounds = array<i64: 1>, scalar_prefetch = 0 : i64, scratch_operands = 0 : i64, tpu.core_type = #tpu.core_type<tc>, window_params = [{transform_indices = @transform_0, window_bounds = array<i64: 128, 1>}, {transform_indices = @transform_1, window_bounds = array<i64: 128, 1>}, {pipeline_mode = #tpu.pipeline_mode<synchronous>, transform_indices = @transform_2, window_bounds = array<i64: 32, 4>}, {pipeline_mode = #tpu.pipeline_mode<synchronous>, transform_indices = @transform_3, window_bounds = array<i64: 48, 4>}, {transform_indices = @transform_4, window_bounds = array<i64: 1, 128>}]} {
    %0 = tpu.iota {dimensions = array<i32: 1>} : vector<128x32xi32>
    %c0 = arith.constant 0 : index
    %c0_0 = arith.constant 0 : index
    %1 = vector.load %arg1[%c0, %c0_0] : memref<128x1xi32, #tpu.memory_space<vmem>>, vector<128x1xi32>
    %2 = vector.broadcast %1 : vector<128x1xi32> to vector<128x32xi32>
    %3 = arith.cmpi eq, %0, %2 : vector<128x32xi32>
    %4 = arith.extui %3 : vector<128x32xi1> to vector<128x32xi32>
    %5 = arith.sitofp %4 : vector<128x32xi32> to vector<128x32xf32>
    %6 = tpu.iota {dimensions = array<i32: 1>} : vector<128x48xi32>
    %c0_1 = arith.constant 0 : index
    %c0_2 = arith.constant 0 : index
    %7 = vector.load %arg2[%c0_1, %c0_2] : memref<128x1xi32, #tpu.memory_space<vmem>>, vector<128x1xi32>
    %8 = vector.broadcast %7 : vector<128x1xi32> to vector<128x48xi32>
    %9 = arith.cmpi eq, %6, %8 : vector<128x48xi32>
    %10 = arith.extui %9 : vector<128x48xi1> to vector<128x48xi32>
    %11 = arith.sitofp %10 : vector<128x48xi32> to vector<128x48xf32>
    %c0_3 = arith.constant 0 : index
    %c0_4 = arith.constant 0 : index
    %12 = vector.load %arg3[%c0_3, %c0_4] : memref<32x4xf32, #tpu.memory_space<vmem>>, vector<32x4xf32>
    %cst = arith.constant dense<0.000000e+00> : vector<128x4xf32>
    %13 = tpu.matmul %5, %12, %cst {dimension_numbers = #tpu.dot_dimension_numbers<[1], [0], [0], [1], [0, 0, 1, 1], [], []>, precision = #tpu.contract_precision<fp32>} : vector<128x32xf32>, vector<32x4xf32>, vector<128x4xf32> -> vector<128x4xf32>
    %c0_5 = arith.constant 0 : index
    %c0_6 = arith.constant 0 : index
    %14 = vector.load %arg4[%c0_5, %c0_6] : memref<48x4xf32, #tpu.memory_space<vmem>>, vector<48x4xf32>
    %cst_7 = arith.constant dense<0.000000e+00> : vector<128x4xf32>
    %15 = tpu.matmul %11, %14, %cst_7 {dimension_numbers = #tpu.dot_dimension_numbers<[1], [0], [0], [1], [0, 0, 1, 1], [], []>, precision = #tpu.contract_precision<fp32>} : vector<128x48xf32>, vector<48x4xf32>, vector<128x4xf32> -> vector<128x4xf32>
    %16 = arith.mulf %13, %15 : vector<128x4xf32>
    %cst_8 = arith.constant dense<0.000000e+00> : vector<128xf32>
    %17 = vector.multi_reduction <add>, %16, %cst_8 [1] : vector<128x4xf32> to vector<128xf32>
    %18 = arith.negf %17 : vector<128xf32>
    %19 = math.exp %18 : vector<128xf32>
    %cst_9 = arith.constant 1.000000e+00 : f32
    %20 = vector.broadcast %cst_9 : f32 to vector<128xf32>
    %21 = arith.addf %20, %19 : vector<128xf32>
    %22 = arith.divf %20, %21 : vector<128xf32>
    %23 = vector.shape_cast %22 : vector<128xf32> to vector<1x128xf32>
    %c0_10 = arith.constant 0 : index
    %c0_11 = arith.constant 0 : index
    %24 = vector.load %arg5[%c0_10, %c0_11] : memref<1x128xf32, #tpu.memory_space<vmem>>, vector<1x128xf32>
    tpu.vector_store %arg5[%c0_10, %c0_11], %23 {strides = array<i32>} : memref<1x128xf32, #tpu.memory_space<vmem>>, vector<1x128xf32>,
    return
  }
  func.func @transform_0(%arg0: i32) -> (i32, i32) {
    %c0_i32 = arith.constant 0 : i32
    %c0_i32_0 = arith.constant 0 : i32
    return %arg0, %c0_i32 : i32, i32
  }
  func.func @transform_1(%arg0: i32) -> (i32, i32) {
    %c0_i32 = arith.constant 0 : i32
    %c0_i32_0 = arith.constant 0 : i32
    return %arg0, %c0_i32 : i32, i32
  }
  func.func @transform_2(%arg0: i32) -> (i32, i32) {
    %c0_i32 = arith.constant 0 : i32
    %c0_i32_0 = arith.constant 0 : i32
    %c0_i32_1 = arith.constant 0 : i32
    return %c0_i32, %c0_i32_0 : i32, i32
  }
  func.func @transform_3(%arg0: i32) -> (i32, i32) {
    %c0_i32 = arith.constant 0 : i32
    %c0_i32_0 = arith.constant 0 : i32
    %c0_i32_1 = arith.constant 0 : i32
    return %c0_i32, %c0_i32_0 : i32, i32
  }
  func.func @transform_4(%arg0: i32) -> (i32, i32) {
    %c0_i32 = arith.constant 0 : i32
    %c0_i32_0 = arith.constant 0 : i32
    return %c0_i32, %arg0 : i32, i32
  }
}

</mosaic_0001>

<llo_original>
// kernel: tpu_custom_call.1
$region0: #{tpu_custom_call.1}
  #allocation0 [shape = 'u32[]', space=smem, size = 0x4, offset = 0x4, fixed_abs, tag = 'smem constant byte address 0x4 - core index']
  #allocation1 [shape = 'u32[72,128]{1,0:T(1,128)}', space=vmem, size = 0x9000, scoped, tag = 'internal scratch']
  %s0 = inlined_call_operand.vmem [shape: s32[128,1], index: 0, kind: input, shape index: {}]
  %s1 = inlined_call_operand.vmem [shape: s32[128,1], index: 1, kind: input, shape index: {}]
  %s2 = inlined_call_operand.vmem [shape: f32[32,4], index: 2, kind: input, shape index: {}]
  %s3 = inlined_call_operand.vmem [shape: f32[48,4], index: 3, kind: input, shape index: {}]
  %s4 = inlined_call_operand.hbm [shape: f32[1,128], index: 4, kind: output, shape index: {}]
  %s5 = sld [smem:[#allocation0]]
  $region26: #{tpu_custom_call.1} parent=0
    _
  %s7 = ssub.s32 1, %s5
  %s8 = scalar_select 0, %s7, %s5
  $region1: #{tpu_custom_call.1} parent=0
    #allocation2 [shape = 'u8[512]{0}', space=vmem, size = 0x400, scoped, tag = 'output window, operand 0, single buffered']
    #allocation3 [shape = 's32[1]{0}', space=sflag, size = 0x4, scoped, tag = 'scoped memory for tpu_custom_call.1']
    %9 = vsyncpa [#allocation3], 0
    // Predicated region
    $region2: #{tpu_custom_call.1} parent=1 // pred_check
      _
    $region3: #{tpu_custom_call.1} parent=1 // pred_check_branch
      %11 = sbr.rel (0) target = $region5
    $region4: #{tpu_custom_call.1} parent=1 // pred_region
      _
    $region5: #{tpu_custom_call.1} parent=1 // pred_fallthru
      _
    // Predicated region
    $region6: #{tpu_custom_call.1} parent=1 // pred_check
      _
    $region7: #{tpu_custom_call.1} parent=1 // pred_check_branch
      %13 = sbr.rel (0) target = $region9
    $region8: #{tpu_custom_call.1} parent=1 // pred_region
      _
    $region9: #{tpu_custom_call.1} parent=1 // pred_fallthru
      _
    // Predicated region
    $region10: #{tpu_custom_call.1} parent=1 // pred_check
      _
    $region11: #{tpu_custom_call.1} parent=1 // pred_check_branch
      %15 = sbr.rel (0) target = $region13
    $region12: #{tpu_custom_call.1} parent=1 // pred_region
      _
    $region13: #{tpu_custom_call.1} parent=1 // pred_fallthru
      _
    // Predicated region
    $region14: #{tpu_custom_call.1} parent=1 // pred_check
      _
    $region15: #{tpu_custom_call.1} parent=1 // pred_check_branch
      %17 = sbr.rel (0) target = $region17
    $region16: #{tpu_custom_call.1} parent=1 // pred_region
      _
    $region17: #{tpu_custom_call.1} parent=1 // pred_fallthru
      _
    %v18 = vlaneseq
    %v19 = vand.u32 %v18, 127
    %v20 = vld [vmem:[%s0] sm:$0xff]
    %v21 = vld [vmem:[%s0 + $0x8] sm:$0xff]
    %v22 = vld [vmem:[%s0 + $0x10] sm:$0xff]
    %v23 = vld [vmem:[%s0 + $0x18] sm:$0xff]
    %v24 = vld [vmem:[%s0 + $0x20] sm:$0xff]
    %v25 = vld [vmem:[%s0 + $0x28] sm:$0xff]
    %v26 = vld [vmem:[%s0 + $0x30] sm:$0xff]
    %v27 = vld [vmem:[%s0 + $0x38] sm:$0xff]
    %v28 = vld [vmem:[%s0 + $0x40] sm:$0xff]
    %v29 = vld [vmem:[%s0 + $0x48] sm:$0xff]
    %v30 = vld [vmem:[%s0 + $0x50] sm:$0xff]
    %v31 = vld [vmem:[%s0 + $0x58] sm:$0xff]
    %v32 = vld [vmem:[%s0 + $0x60] sm:$0xff]
    %v33 = vld [vmem:[%s0 + $0x68] sm:$0xff]
    %v34 = vld [vmem:[%s0 + $0x70] sm:$0xff]
    %v35 = vld [vmem:[%s0 + $0x78] sm:$0xff]
    %36 = vset.pattern.permute.xlu0 0
    %37 = vperm.xlu0 %36, %v20
    %v38 = vpop.permute.xlu0 %37
    %39 = vset.pattern.permute.xlu0 0
    %40 = vperm.xlu0 %39, %v21
    %v41 = vpop.permute.xlu0 %40
    %42 = vset.pattern.permute.xlu0 0
    %43 = vperm.xlu0 %42, %v22
    %v44 = vpop.permute.xlu0 %43
    %45 = vset.pattern.permute.xlu0 0
    %46 = vperm.xlu0 %45, %v23
    %v47 = vpop.permute.xlu0 %46
    %48 = vset.pattern.permute.xlu0 0
    %49 = vperm.xlu0 %48, %v24
    %v50 = vpop.permute.xlu0 %49
    %51 = vset.pattern.permute.xlu0 0
    %52 = vperm.xlu0 %51, %v25
    %v53 = vpop.permute.xlu0 %52
    %54 = vset.pattern.permute.xlu0 0
    %55 = vperm.xlu0 %54, %v26
    %v56 = vpop.permute.xlu0 %55
    %57 = vset.pattern.permute.xlu0 0
    %58 = vperm.xlu0 %57, %v27
    %v59 = vpop.permute.xlu0 %58
    %60 = vset.pattern.permute.xlu0 0
    %61 = vperm.xlu0 %60, %v28
    %v62 = vpop.permute.xlu0 %61
    %63 = vset.pattern.permute.xlu0 0
    %64 = vperm.xlu0 %63, %v29
    %v65 = vpop.permute.xlu0 %64
    %66 = vset.pattern.permute.xlu0 0
    %67 = vperm.xlu0 %66, %v30
    %v68 = vpop.permute.xlu0 %67
    %69 = vset.pattern.permute.xlu0 0
    %70 = vperm.xlu0 %69, %v31
    %v71 = vpop.permute.xlu0 %70
    %72 = vset.pattern.permute.xlu0 0
    %73 = vperm.xlu0 %72, %v32
    %v74 = vpop.permute.xlu0 %73
    %75 = vset.pattern.permute.xlu0 0
    %76 = vperm.xlu0 %75, %v33
    %v77 = vpop.permute.xlu0 %76
    %78 = vset.pattern.permute.xlu0 0
    %79 = vperm.xlu0 %78, %v34
    %v80 = vpop.permute.xlu0 %79
    %81 = vset.pattern.permute.xlu0 0
    %82 = vperm.xlu0 %81, %v35
    %v83 = vpop.permute.xlu0 %82
    %vm84 = vcmp.eq.s32.totalorder %v19, %v38
    %vm85 = vcmp.eq.s32.totalorder %v19, %v41
    %vm86 = vcmp.eq.s32.totalorder %v19, %v44
    %vm87 = vcmp.eq.s32.totalorder %v19, %v47
    %vm88 = vcmp.eq.s32.totalorder %v19, %v50
    %vm89 = vcmp.eq.s32.totalorder %v19, %v53
    %vm90 = vcmp.eq.s32.totalorder %v19, %v56
    %vm91 = vcmp.eq.s32.totalorder %v19, %v59
    %vm92 = vcmp.eq.s32.totalorder %v19, %v62
    %vm93 = vcmp.eq.s32.totalorder %v19, %v65
    %vm94 = vcmp.eq.s32.totalorder %v19, %v68
    %vm95 = vcmp.eq.s32.totalorder %v19, %v71
    %vm96 = vcmp.eq.s32.totalorder %v19, %v74
    %vm97 = vcmp.eq.s32.totalorder %v19, %v77
    %vm98 = vcmp.eq.s32.totalorder %v19, %v80
    %vm99 = vcmp.eq.s32.totalorder %v19, %v83
    %v100 = vsel %vm84, 1, 0
    %v101 = vsel %vm85, 1, 0
    %v102 = vsel %vm86, 1, 0
    %v103 = vsel %vm87, 1, 0
    %v104 = vsel %vm88, 1, 0
    %v105 = vsel %vm89, 1, 0
    %v106 = vsel %vm90, 1, 0
    %v107 = vsel %vm91, 1, 0
    %v108 = vsel %vm92, 1, 0
    %v109 = vsel %vm93, 1, 0
    %v110 = vsel %vm94, 1, 0
    %v111 = vsel %vm95, 1, 0
    %v112 = vsel %vm96, 1, 0
    %v113 = vsel %vm97, 1, 0
    %v114 = vsel %vm98, 1, 0
    %v115 = vsel %vm99, 1, 0
    %v116 = vcvt.s32.f32 %v100
    %v117 = vcvt.s32.f32 %v101
    %v118 = vcvt.s32.f32 %v102
    %v119 = vcvt.s32.f32 %v103
    %v120 = vcvt.s32.f32 %v104
    %v121 = vcvt.s32.f32 %v105
    %v122 = vcvt.s32.f32 %v106
    %v123 = vcvt.s32.f32 %v107
    %v124 = vcvt.s32.f32 %v108
    %v125 = vcvt.s32.f32 %v109
    %v126 = vcvt.s32.f32 %v110
    %v127 = vcvt.s32.f32 %v111
    %v128 = vcvt.s32.f32 %v112
    %v129 = vcvt.s32.f32 %v113
    %v130 = vcvt.s32.f32 %v114
    %v131 = vcvt.s32.f32 %v115
    %v132 = vld [vmem:[%s1] sm:$0xff]
    %v133 = vld [vmem:[%s1 + $0x8] sm:$0xff]
    %v134 = vld [vmem:[%s1 + $0x10] sm:$0xff]
    %v135 = vld [vmem:[%s1 + $0x18] sm:$0xff]
    %v136 = vld [vmem:[%s1 + $0x20] sm:$0xff]
    %v137 = vld [vmem:[%s1 + $0x28] sm:$0xff]
    %v138 = vld [vmem:[%s1 + $0x30] sm:$0xff]
    %v139 = vld [vmem:[%s1 + $0x38] sm:$0xff]
    %v140 = vld [vmem:[%s1 + $0x40] sm:$0xff]
    %v141 = vld [vmem:[%s1 + $0x48] sm:$0xff]
    %v142 = vld [vmem:[%s1 + $0x50] sm:$0xff]
    %v143 = vld [vmem:[%s1 + $0x58] sm:$0xff]
    %v144 = vld [vmem:[%s1 + $0x60] sm:$0xff]
    %v145 = vld [vmem:[%s1 + $0x68] sm:$0xff]
    %v146 = vld [vmem:[%s1 + $0x70] sm:$0xff]
    %v147 = vld [vmem:[%s1 + $0x78] sm:$0xff]
    %148 = vset.pattern.permute.xlu0 0
    %149 = vperm.xlu0 %148, %v132
    %v150 = vpop.permute.xlu0 %149
    %151 = vset.pattern.permute.xlu0 0
    %152 = vperm.xlu0 %151, %v133
    %v153 = vpop.permute.xlu0 %152
    %154 = vset.pattern.permute.xlu0 0
    %155 = vperm.xlu0 %154, %v134
    %v156 = vpop.permute.xlu0 %155
    %157 = vset.pattern.permute.xlu0 0
    %158 = vperm.xlu0 %157, %v135
    %v159 = vpop.permute.xlu0 %158
    %160 = vset.pattern.permute.xlu0 0
    %161 = vperm.xlu0 %160, %v136
    %v162 = vpop.permute.xlu0 %161
    %163 = vset.pattern.permute.xlu0 0
    %164 = vperm.xlu0 %163, %v137
    %v165 = vpop.permute.xlu0 %164
    %166 = vset.pattern.permute.xlu0 0
    %167 = vperm.xlu0 %166, %v138
    %v168 = vpop.permute.xlu0 %167
    %169 = vset.pattern.permute.xlu0 0
    %170 = vperm.xlu0 %169, %v139
    %v171 = vpop.permute.xlu0 %170
    %172 = vset.pattern.permute.xlu0 0
    %173 = vperm.xlu0 %172, %v140
    %v174 = vpop.permute.xlu0 %173
    %175 = vset.pattern.permute.xlu0 0
    %176 = vperm.xlu0 %175, %v141
    %v177 = vpop.permute.xlu0 %176
    %178 = vset.pattern.permute.xlu0 0
    %179 = vperm.xlu0 %178, %v142
    %v180 = vpop.permute.xlu0 %179
    %181 = vset.pattern.permute.xlu0 0
    %182 = vperm.xlu0 %181, %v143
    %v183 = vpop.permute.xlu0 %182
    %184 = vset.pattern.permute.xlu0 0
    %185 = vperm.xlu0 %184, %v144
    %v186 = vpop.permute.xlu0 %185
    %187 = vset.pattern.permute.xlu0 0
    %188 = vperm.xlu0 %187, %v145
    %v189 = vpop.permute.xlu0 %188
    %190 = vset.pattern.permute.xlu0 0
    %191 = vperm.xlu0 %190, %v146
    %v192 = vpop.permute.xlu0 %191
    %193 = vset.pattern.permute.xlu0 0
    %194 = vperm.xlu0 %193, %v147
    %v195 = vpop.permute.xlu0 %194
    %vm196 = vcmp.eq.s32.totalorder %v19, %v150
    %vm197 = vcmp.eq.s32.totalorder %v19, %v153
    %vm198 = vcmp.eq.s32.totalorder %v19, %v156
    %vm199 = vcmp.eq.s32.totalorder %v19, %v159
    %vm200 = vcmp.eq.s32.totalorder %v19, %v162
    %vm201 = vcmp.eq.s32.totalorder %v19, %v165
    %vm202 = vcmp.eq.s32.totalorder %v19, %v168
    %vm203 = vcmp.eq.s32.totalorder %v19, %v171
    %vm204 = vcmp.eq.s32.totalorder %v19, %v174
    %vm205 = vcmp.eq.s32.totalorder %v19, %v177
    %vm206 = vcmp.eq.s32.totalorder %v19, %v180
    %vm207 = vcmp.eq.s32.totalorder %v19, %v183
    %vm208 = vcmp.eq.s32.totalorder %v19, %v186
    %vm209 = vcmp.eq.s32.totalorder %v19, %v189
    %vm210 = vcmp.eq.s32.totalorder %v19, %v192
    %vm211 = vcmp.eq.s32.totalorder %v19, %v195
    %v212 = vsel %vm196, 1, 0
    %v213 = vsel %vm197, 1, 0
    %v214 = vsel %vm198, 1, 0
    %v215 = vsel %vm199, 1, 0
    %v216 = vsel %vm200, 1, 0
    %v217 = vsel %vm201, 1, 0
    %v218 = vsel %vm202, 1, 0
    %v219 = vsel %vm203, 1, 0
    %v220 = vsel %vm204, 1, 0
    %v221 = vsel %vm205, 1, 0
    %v222 = vsel %vm206, 1, 0
    %v223 = vsel %vm207, 1, 0
    %v224 = vsel %vm208, 1, 0
    %v225 = vsel %vm209, 1, 0
    %v226 = vsel %vm210, 1, 0
    %v227 = vsel %vm211, 1, 0
    %v228 = vcvt.s32.f32 %v212
    %v229 = vcvt.s32.f32 %v213
    %v230 = vcvt.s32.f32 %v214
    %v231 = vcvt.s32.f32 %v215
    %v232 = vcvt.s32.f32 %v216
    %v233 = vcvt.s32.f32 %v217
    %v234 = vcvt.s32.f32 %v218
    %v235 = vcvt.s32.f32 %v219
    %v236 = vcvt.s32.f32 %v220
    %v237 = vcvt.s32.f32 %v221
    %v238 = vcvt.s32.f32 %v222
    %v239 = vcvt.s32.f32 %v223
    %v240 = vcvt.s32.f32 %v224
    %v241 = vcvt.s32.f32 %v225
    %v242 = vcvt.s32.f32 %v226
    %v243 = vcvt.s32.f32 %v227
    %v244 = vld [vmem:[%s2] sm:$0xff]
    %v245 = vld [vmem:[%s2 + $0x8] sm:$0xff]
    %v246 = vld [vmem:[%s2 + $0x10] sm:$0xff]
    %v247 = vld [vmem:[%s2 + $0x18] sm:$0xff]
    %vm248 = vcmask 261120
    %v250 = vsel %vm248, %v116, 0
    %v253 = vsel %vm248, %v117, 0
    %v256 = vsel %vm248, %v118, 0
    %v259 = vsel %vm248, %v119, 0
    %v262 = vsel %vm248, %v120, 0
    %v265 = vsel %vm248, %v121, 0
    %v268 = vsel %vm248, %v122, 0
    %v271 = vsel %vm248, %v123, 0
    %v274 = vsel %vm248, %v124, 0
    %v277 = vsel %vm248, %v125, 0
    %v280 = vsel %vm248, %v126, 0
    %v283 = vsel %vm248, %v127, 0
    %v286 = vsel %vm248, %v128, 0
    %v289 = vsel %vm248, %v129, 0
    %v292 = vsel %vm248, %v130, 0
    %v295 = vsel %vm248, %v131, 0
    %297 = vmatpush.msra.mxu0 0.0
    %298 = vmatpush.msra.mxu0 0.0
    %299 = vmatpush.msra.mxu0 0.0
    %300 = vmatpush.msra.mxu0 0.0
    %301 = vmatpush.msra.mxu0 0.0
    %302 = vmatpush.msra.mxu0 0.0
    %303 = vmatpush.msra.mxu0 0.0
    %304 = vmatpush.msra.mxu0 0.0
    %305 = vmatpush.msra.mxu0 0.0
    %306 = vmatpush.msra.mxu0 0.0
    %307 = vmatpush.msra.mxu0 0.0
    %308 = vmatpush.msra.mxu0 0.0
    %v309 = vand.u32 %v247, 4294901760
    %310 = vmatpush.msra.mxu0 %v309
    %v311 = vand.u32 %v246, 4294901760
    %312 = vmatpush.msra.mxu0 %v311
    %v313 = vand.u32 %v245, 4294901760
    %314 = vmatpush.msra.mxu0 %v313
    %v315 = vand.u32 %v244, 4294901760
    %316 = vmatpush.msra.mxu0 %v315
    %v317 = vand.u32 %v250, 4294901760
    %v318 = vsub.f32 %v250, %v317
    %v319 = vand.u32 %v318, 4294901760
    %v320 = vsub.f32 %v318, %v319
    %v321 = vand.u32 %v320, 4294901760
    %322 = vmatmul.f32.gmra.mxu0 %v321
    %v323 = vpop.f32.mrf.mxu0
    %v324 = vadd.f32 0.0, %v323
    %v325 = vand.u32 %v253, 4294901760
    %v326 = vsub.f32 %v253, %v325
    %v327 = vand.u32 %v326, 4294901760
    %v328 = vsub.f32 %v326, %v327
    %v329 = vand.u32 %v328, 4294901760
    %330 = vmatmul.f32.gmra.mxu0 %v329
    %v331 = vpop.f32.mrf.mxu0
    %v332 = vadd.f32 0.0, %v331
    %v333 = vand.u32 %v256, 4294901760
    %v334 = vsub.f32 %v256, %v333
    %v335 = vand.u32 %v334, 4294901760
    %v336 = vsub.f32 %v334, %v335
    %v337 = vand.u32 %v336, 4294901760
    %338 = vmatmul.f32.gmra.mxu0 %v337
    %v339 = vpop.f32.mrf.mxu0
    %v340 = vadd.f32 0.0, %v339
    %v341 = vand.u32 %v259, 4294901760
    %v342 = vsub.f32 %v259, %v341
    %v343 = vand.u32 %v342, 4294901760
    %v344 = vsub.f32 %v342, %v343
    %v345 = vand.u32 %v344, 4294901760
    %346 = vmatmul.f32.gmra.mxu0 %v345
    %v347 = vpop.f32.mrf.mxu0
    %v348 = vadd.f32 0.0, %v347
    %v349 = vand.u32 %v262, 4294901760
    %v350 = vsub.f32 %v262, %v349
    %v351 = vand.u32 %v350, 4294901760
    %v352 = vsub.f32 %v350, %v351
    %v353 = vand.u32 %v352, 4294901760
    %354 = vmatmul.f32.gmra.mxu0 %v353
    %v355 = vpop.f32.mrf.mxu0
    %v356 = vadd.f32 0.0, %v355
    %v357 = vand.u32 %v265, 4294901760
    %v358 = vsub.f32 %v265, %v357
    %v359 = vand.u32 %v358, 4294901760
    %v360 = vsub.f32 %v358, %v359
    %v361 = vand.u32 %v360, 4294901760
    %362 = vmatmul.f32.gmra.mxu0 %v361
    %v363 = vpop.f32.mrf.mxu0
    %v364 = vadd.f32 0.0, %v363
    %v365 = vand.u32 %v268, 4294901760
    %v366 = vsub.f32 %v268, %v365
    %v367 = vand.u32 %v366, 4294901760
    %v368 = vsub.f32 %v366, %v367
    %v369 = vand.u32 %v368, 4294901760
    %370 = vmatmul.f32.gmra.mxu0 %v369
    %v371 = vpop.f32.mrf.mxu0
    %v372 = vadd.f32 0.0, %v371
    %v373 = vand.u32 %v271, 4294901760
    %v374 = vsub.f32 %v271, %v373
    %v375 = vand.u32 %v374, 4294901760
    %v376 = vsub.f32 %v374, %v375
    %v377 = vand.u32 %v376, 4294901760
    %378 = vmatmul.f32.gmra.mxu0 %v377
    %v379 = vpop.f32.mrf.mxu0
    %v380 = vadd.f32 0.0, %v379
    %v381 = vand.u32 %v274, 4294901760
    %v382 = vsub.f32 %v274, %v381
    %v383 = vand.u32 %v382, 4294901760
    %v384 = vsub.f32 %v382, %v383
    %v385 = vand.u32 %v384, 4294901760
    %386 = vmatmul.f32.gmra.mxu0 %v385
    %v387 = vpop.f32.mrf.mxu0
    %v388 = vadd.f32 0.0, %v387
    %v389 = vand.u32 %v277, 4294901760
    %v390 = vsub.f32 %v277, %v389
    %v391 = vand.u32 %v390, 4294901760
    %v392 = vsub.f32 %v390, %v391
    %v393 = vand.u32 %v392, 4294901760
    %394 = vmatmul.f32.gmra.mxu0 %v393
    %v395 = vpop.f32.mrf.mxu0
    %v396 = vadd.f32 0.0, %v395
    %v397 = vand.u32 %v280, 4294901760
    %v398 = vsub.f32 %v280, %v397
    %v399 = vand.u32 %v398, 4294901760
    %v400 = vsub.f32 %v398, %v399
    %v401 = vand.u32 %v400, 4294901760
    %402 = vmatmul.f32.gmra.mxu0 %v401
    %v403 = vpop.f32.mrf.mxu0
    %v404 = vadd.f32 0.0, %v403
    %v405 = vand.u32 %v283, 4294901760
    %v406 = vsub.f32 %v283, %v405
    %v407 = vand.u32 %v406, 4294901760
    %v408 = vsub.f32 %v406, %v407
    %v409 = vand.u32 %v408, 4294901760
    %410 = vmatmul.f32.gmra.mxu0 %v409
    %v411 = vpop.f32.mrf.mxu0
    %v412 = vadd.f32 0.0, %v411
    %v413 = vand.u32 %v286, 4294901760
    %v414 = vsub.f32 %v286, %v413
    %v415 = vand.u32 %v414, 4294901760
    %v416 = vsub.f32 %v414, %v415
    %v417 = vand.u32 %v416, 4294901760
    %418 = vmatmul.f32.gmra.mxu0 %v417
    %v419 = vpop.f32.mrf.mxu0
    %v420 = vadd.f32 0.0, %v419
    %v421 = vand.u32 %v289, 4294901760
    %v422 = vsub.f32 %v289, %v421
    %v423 = vand.u32 %v422, 4294901760
    %v424 = vsub.f32 %v422, %v423
    %v425 = vand.u32 %v424, 4294901760
    %426 = vmatmul.f32.gmra.mxu0 %v425
    %v427 = vpop.f32.mrf.mxu0
    %v428 = vadd.f32 0.0, %v427
    %v429 = vand.u32 %v292, 4294901760
    %v430 = vsub.f32 %v292, %v429
    %v431 = vand.u32 %v430, 4294901760
    %v432 = vsub.f32 %v430, %v431
    %v433 = vand.u32 %v432, 4294901760
    %434 = vmatmul.f32.gmra.mxu0 %v433
    %v435 = vpop.f32.mrf.mxu0
    %v436 = vadd.f32 0.0, %v435
    %v437 = vand.u32 %v295, 4294901760
    %v438 = vsub.f32 %v295, %v437
    %v439 = vand.u32 %v438, 4294901760
    %v440 = vsub.f32 %v438, %v439
    %v441 = vand.u32 %v440, 4294901760
    %442 = vmatmul.f32.gmra.mxu0 %v441
    %v443 = vpop.f32.mrf.mxu0
    %v444 = vadd.f32 0.0, %v443
    %445 = vdwg.mxu0
    %446 = vmatpush.msra.mxu0 0.0
    %447 = vmatpush.msra.mxu0 0.0
    %448 = vmatpush.msra.mxu0 0.0
    %449 = vmatpush.msra.mxu0 0.0
    %450 = vmatpush.msra.mxu0 0.0
    %451 = vmatpush.msra.mxu0 0.0
    %452 = vmatpush.msra.mxu0 0.0
    %453 = vmatpush.msra.mxu0 0.0
    %454 = vmatpush.msra.mxu0 0.0
    %455 = vmatpush.msra.mxu0 0.0
    %456 = vmatpush.msra.mxu0 0.0
    %457 = vmatpush.msra.mxu0 0.0
    %v458 = vand.u32 %v247, 4294901760
    %v459 = vsub.f32 %v247, %v458
    %v460 = vand.u32 %v459, 4294901760
    %v461 = vsub.f32 %v459, %v460
    %v462 = vand.u32 %v461, 4294901760
    %463 = vmatpush.msra.mxu0 %v462
    %v464 = vand.u32 %v246, 4294901760
    %v465 = vsub.f32 %v246, %v464
    %v466 = vand.u32 %v465, 4294901760
    %v467 = vsub.f32 %v465, %v466
    %v468 = vand.u32 %v467, 4294901760
    %469 = vmatpush.msra.mxu0 %v468
    %v470 = vand.u32 %v245, 4294901760
    %v471 = vsub.f32 %v245, %v470
    %v472 = vand.u32 %v471, 4294901760
    %v473 = vsub.f32 %v471, %v472
    %v474 = vand.u32 %v473, 4294901760
    %475 = vmatpush.msra.mxu0 %v474
    %v476 = vand.u32 %v244, 4294901760
    %v477 = vsub.f32 %v244, %v476
    %v478 = vand.u32 %v477, 4294901760
    %v479 = vsub.f32 %v477, %v478
    %v480 = vand.u32 %v479, 4294901760
    %481 = vmatpush.msra.mxu0 %v480
    %v482 = vand.u32 %v250, 4294901760
    %483 = vmatmul.f32.gmra.mxu0 %v482
    %v484 = vpop.f32.mrf.mxu0
    %v485 = vadd.f32 %v324, %v484
    %v486 = vand.u32 %v253, 4294901760
    %487 = vmatmul.f32.gmra.mxu0 %v486
    %v488 = vpop.f32.mrf.mxu0
    %v489 = vadd.f32 %v332, %v488
    %v490 = vand.u32 %v256, 4294901760
    %491 = vmatmul.f32.gmra.mxu0 %v490
    %v492 = vpop.f32.mrf.mxu0
    %v493 = vadd.f32 %v340, %v492
    %v494 = vand.u32 %v259, 4294901760
    %495 = vmatmul.f32.gmra.mxu0 %v494
    %v496 = vpop.f32.mrf.mxu0
    %v497 = vadd.f32 %v348, %v496
    %v498 = vand.u32 %v262, 4294901760
    %499 = vmatmul.f32.gmra.mxu0 %v498
    %v500 = vpop.f32.mrf.mxu0
    %v501 = vadd.f32 %v356, %v500
    %v502 = vand.u32 %v265, 4294901760
    %503 = vmatmul.f32.gmra.mxu0 %v502
    %v504 = vpop.f32.mrf.mxu0
    %v505 = vadd.f32 %v364, %v504
    %v506 = vand.u32 %v268, 4294901760
    %507 = vmatmul.f32.gmra.mxu0 %v506
    %v508 = vpop.f32.mrf.mxu0
    %v509 = vadd.f32 %v372, %v508
    %v510 = vand.u32 %v271, 4294901760
    %511 = vmatmul.f32.gmra.mxu0 %v510
    %v512 = vpop.f32.mrf.mxu0
    %v513 = vadd.f32 %v380, %v512
    %v514 = vand.u32 %v274, 4294901760
    %515 = vmatmul.f32.gmra.mxu0 %v514
    %v516 = vpop.f32.mrf.mxu0
    %v517 = vadd.f32 %v388, %v516
    %v518 = vand.u32 %v277, 4294901760
    %519 = vmatmul.f32.gmra.mxu0 %v518
    %v520 = vpop.f32.mrf.mxu0
    %v521 = vadd.f32 %v396, %v520
    %v522 = vand.u32 %v280, 4294901760
    %523 = vmatmul.f32.gmra.mxu0 %v522
    %v524 = vpop.f32.mrf.mxu0
    %v525 = vadd.f32 %v404, %v524
    %v526 = vand.u32 %v283, 4294901760
    %527 = vmatmul.f32.gmra.mxu0 %v526
    %v528 = vpop.f32.mrf.mxu0
    %v529 = vadd.f32 %v412, %v528
    %v530 = vand.u32 %v286, 4294901760
    %531 = vmatmul.f32.gmra.mxu0 %v530
    %v532 = vpop.f32.mrf.mxu0
    %v533 = vadd.f32 %v420, %v532
    %v534 = vand.u32 %v289, 4294901760
    %535 = vmatmul.f32.gmra.mxu0 %v534
    %v536 = vpop.f32.mrf.mxu0
    %v537 = vadd.f32 %v428, %v536
    %v538 = vand.u32 %v292, 4294901760
    %539 = vmatmul.f32.gmra.mxu0 %v538
    %v540 = vpop.f32.mrf.mxu0
    %v541 = vadd.f32 %v436, %v540
    %v542 = vand.u32 %v295, 4294901760
    %543 = vmatmul.f32.gmra.mxu0 %v542
    %v544 = vpop.f32.mrf.mxu0
    %v545 = vadd.f32 %v444, %v544
    %546 = vdwg.mxu0
    %547 = vmatpush.msra.mxu0 0.0
    %548 = vmatpush.msra.mxu0 0.0
    %549 = vmatpush.msra.mxu0 0.0
    %550 = vmatpush.msra.mxu0 0.0
    %551 = vmatpush.msra.mxu0 0.0
    %552 = vmatpush.msra.mxu0 0.0
    %553 = vmatpush.msra.mxu0 0.0
    %554 = vmatpush.msra.mxu0 0.0
    %555 = vmatpush.msra.mxu0 0.0
    %556 = vmatpush.msra.mxu0 0.0
    %557 = vmatpush.msra.mxu0 0.0
    %558 = vmatpush.msra.mxu0 0.0
    %v559 = vand.u32 %v247, 4294901760
    %v560 = vsub.f32 %v247, %v559
    %561 = vmatpush.msra.mxu0 %v560
    %v562 = vand.u32 %v246, 4294901760
    %v563 = vsub.f32 %v246, %v562
    %564 = vmatpush.msra.mxu0 %v563
    %v565 = vand.u32 %v245, 4294901760
    %v566 = vsub.f32 %v245, %v565
    %567 = vmatpush.msra.mxu0 %v566
    %v568 = vand.u32 %v244, 4294901760
    %v569 = vsub.f32 %v244, %v568
    %570 = vmatpush.msra.mxu0 %v569
    %v571 = vand.u32 %v250, 4294901760
    %v572 = vsub.f32 %v250, %v571
    %573 = vmatmul.f32.gmra.mxu0 %v572
    %v574 = vpop.f32.mrf.mxu0
    %v575 = vadd.f32 %v485, %v574
    %v576 = vand.u32 %v253, 4294901760
    %v577 = vsub.f32 %v253, %v576
    %578 = vmatmul.f32.gmra.mxu0 %v577
    %v579 = vpop.f32.mrf.mxu0
    %v580 = vadd.f32 %v489, %v579
    %v581 = vand.u32 %v256, 4294901760
    %v582 = vsub.f32 %v256, %v581
    %583 = vmatmul.f32.gmra.mxu0 %v582
    %v584 = vpop.f32.mrf.mxu0
    %v585 = vadd.f32 %v493, %v584
    %v586 = vand.u32 %v259, 4294901760
    %v587 = vsub.f32 %v259, %v586
    %588 = vmatmul.f32.gmra.mxu0 %v587
    %v589 = vpop.f32.mrf.mxu0
    %v590 = vadd.f32 %v497, %v589
    %v591 = vand.u32 %v262, 4294901760
    %v592 = vsub.f32 %v262, %v591
    %593 = vmatmul.f32.gmra.mxu0 %v592
    %v594 = vpop.f32.mrf.mxu0
    %v595 = vadd.f32 %v501, %v594
    %v596 = vand.u32 %v265, 4294901760
    %v597 = vsub.f32 %v265, %v596
    %598 = vmatmul.f32.gmra.mxu0 %v597
    %v599 = vpop.f32.mrf.mxu0
    %v600 = vadd.f32 %v505, %v599
    %v601 = vand.u32 %v268, 4294901760
    %v602 = vsub.f32 %v268, %v601
    %603 = vmatmul.f32.gmra.mxu0 %v602
    %v604 = vpop.f32.mrf.mxu0
    %v605 = vadd.f32 %v509, %v604
    %v606 = vand.u32 %v271, 4294901760
    %v607 = vsub.f32 %v271, %v606
    %608 = vmatmul.f32.gmra.mxu0 %v607
    %v609 = vpop.f32.mrf.mxu0
    %v610 = vadd.f32 %v513, %v609
    %v611 = vand.u32 %v274, 4294901760
    %v612 = vsub.f32 %v274, %v611
    %613 = vmatmul.f32.gmra.mxu0 %v612
    %v614 = vpop.f32.mrf.mxu0
    %v615 = vadd.f32 %v517, %v614
    %v616 = vand.u32 %v277, 4294901760
    %v617 = vsub.f32 %v277, %v616
    %618 = vmatmul.f32.gmra.mxu0 %v617
    %v619 = vpop.f32.mrf.mxu0
    %v620 = vadd.f32 %v521, %v619
    %v621 = vand.u32 %v280, 4294901760
    %v622 = vsub.f32 %v280, %v621
    %623 = vmatmul.f32.gmra.mxu0 %v622
    %v624 = vpop.f32.mrf.mxu0
    %v625 = vadd.f32 %v525, %v624
    %v626 = vand.u32 %v283, 4294901760
    %v627 = vsub.f32 %v283, %v626
    %628 = vmatmul.f32.gmra.mxu0 %v627
    %v629 = vpop.f32.mrf.mxu0
    %v630 = vadd.f32 %v529, %v629
    %v631 = vand.u32 %v286, 4294901760
    %v632 = vsub.f32 %v286, %v631
    %633 = vmatmul.f32.gmra.mxu0 %v632
    %v634 = vpop.f32.mrf.mxu0
    %v635 = vadd.f32 %v533, %v634
    %v636 = vand.u32 %v289, 4294901760
    %v637 = vsub.f32 %v289, %v636
    %638 = vmatmul.f32.gmra.mxu0 %v637
    %v639 = vpop.f32.mrf.mxu0
    %v640 = vadd.f32 %v537, %v639
    %v641 = vand.u32 %v292, 4294901760
    %v642 = vsub.f32 %v292, %v641
    %643 = vmatmul.f32.gmra.mxu0 %v642
    %v644 = vpop.f32.mrf.mxu0
    %v645 = vadd.f32 %v541, %v644
    %v646 = vand.u32 %v295, 4294901760
    %v647 = vsub.f32 %v295, %v646
    %648 = vmatmul.f32.gmra.mxu0 %v647
    %v649 = vpop.f32.mrf.mxu0
    %v650 = vadd.f32 %v545, %v649
    %651 = vdwg.mxu0
    %652 = vmatpush.msra.mxu0 0.0
    %653 = vmatpush.msra.mxu0 0.0
    %654 = vmatpush.msra.mxu0 0.0
    %655 = vmatpush.msra.mxu0 0.0
    %656 = vmatpush.msra.mxu0 0.0
    %657 = vmatpush.msra.mxu0 0.0
    %658 = vmatpush.msra.mxu0 0.0
    %659 = vmatpush.msra.mxu0 0.0
    %660 = vmatpush.msra.mxu0 0.0
    %661 = vmatpush.msra.mxu0 0.0
    %662 = vmatpush.msra.mxu0 0.0
    %663 = vmatpush.msra.mxu0 0.0
    %v664 = vand.u32 %v247, 4294901760
    %665 = vmatpush.msra.mxu0 %v664
    %v666 = vand.u32 %v246, 4294901760
    %667 = vmatpush.msra.mxu0 %v666
    %v668 = vand.u32 %v245, 4294901760
    %669 = vmatpush.msra.mxu0 %v668
    %v670 = vand.u32 %v244, 4294901760
    %671 = vmatpush.msra.mxu0 %v670
    %v672 = vand.u32 %v250, 4294901760
    %v673 = vsub.f32 %v250, %v672
    %v674 = vand.u32 %v673, 4294901760
    %675 = vmatmul.f32.gmra.mxu0 %v674
    %v676 = vpop.f32.mrf.mxu0
    %v677 = vadd.f32 %v575, %v676
    %v678 = vand.u32 %v253, 4294901760
    %v679 = vsub.f32 %v253, %v678
    %v680 = vand.u32 %v679, 4294901760
    %681 = vmatmul.f32.gmra.mxu0 %v680
    %v682 = vpop.f32.mrf.mxu0
    %v683 = vadd.f32 %v580, %v682
    %v684 = vand.u32 %v256, 4294901760
    %v685 = vsub.f32 %v256, %v684
    %v686 = vand.u32 %v685, 4294901760
    %687 = vmatmul.f32.gmra.mxu0 %v686
    %v688 = vpop.f32.mrf.mxu0
    %v689 = vadd.f32 %v585, %v688
    %v690 = vand.u32 %v259, 4294901760
    %v691 = vsub.f32 %v259, %v690
    %v692 = vand.u32 %v691, 4294901760
    %693 = vmatmul.f32.gmra.mxu0 %v692
    %v694 = vpop.f32.mrf.mxu0
    %v695 = vadd.f32 %v590, %v694
    %v696 = vand.u32 %v262, 4294901760
    %v697 = vsub.f32 %v262, %v696
    %v698 = vand.u32 %v697, 4294901760
    %699 = vmatmul.f32.gmra.mxu0 %v698
    %v700 = vpop.f32.mrf.mxu0
    %v701 = vadd.f32 %v595, %v700
    %v702 = vand.u32 %v265, 4294901760
    %v703 = vsub.f32 %v265, %v702
    %v704 = vand.u32 %v703, 4294901760
    %705 = vmatmul.f32.gmra.mxu0 %v704
    %v706 = vpop.f32.mrf.mxu0
    %v707 = vadd.f32 %v600, %v706
    %v708 = vand.u32 %v268, 4294901760
    %v709 = vsub.f32 %v268, %v708
    %v710 = vand.u32 %v709, 4294901760
    %711 = vmatmul.f32.gmra.mxu0 %v710
    %v712 = vpop.f32.mrf.mxu0
    %v713 = vadd.f32 %v605, %v712
    %v714 = vand.u32 %v271, 4294901760
    %v715 = vsub.f32 %v271, %v714
    %v716 = vand.u32 %v715, 4294901760
    %717 = vmatmul.f32.gmra.mxu0 %v716
    %v718 = vpop.f32.mrf.mxu0
    %v719 = vadd.f32 %v610, %v718
    %v720 = vand.u32 %v274, 4294901760
    %v721 = vsub.f32 %v274, %v720
    %v722 = vand.u32 %v721, 4294901760
    %723 = vmatmul.f32.gmra.mxu0 %v722
    %v724 = vpop.f32.mrf.mxu0
    %v725 = vadd.f32 %v615, %v724
    %v726 = vand.u32 %v277, 4294901760
    %v727 = vsub.f32 %v277, %v726
    %v728 = vand.u32 %v727, 4294901760
    %729 = vmatmul.f32.gmra.mxu0 %v728
    %v730 = vpop.f32.mrf.mxu0
    %v731 = vadd.f32 %v620, %v730
    %v732 = vand.u32 %v280, 4294901760
    %v733 = vsub.f32 %v280, %v732
    %v734 = vand.u32 %v733, 4294901760
    %735 = vmatmul.f32.gmra.mxu0 %v734
    %v736 = vpop.f32.mrf.mxu0
    %v737 = vadd.f32 %v625, %v736
    %v738 = vand.u32 %v283, 4294901760
    %v739 = vsub.f32 %v283, %v738
    %v740 = vand.u32 %v739, 4294901760
    %741 = vmatmul.f32.gmra.mxu0 %v740
    %v742 = vpop.f32.mrf.mxu0
    %v743 = vadd.f32 %v630, %v742
    %v744 = vand.u32 %v286, 4294901760
    %v745 = vsub.f32 %v286, %v744
    %v746 = vand.u32 %v745, 4294901760
    %747 = vmatmul.f32.gmra.mxu0 %v746
    %v748 = vpop.f32.mrf.mxu0
    %v749 = vadd.f32 %v635, %v748
    %v750 = vand.u32 %v289, 4294901760
    %v751 = vsub.f32 %v289, %v750
    %v752 = vand.u32 %v751, 4294901760
    %753 = vmatmul.f32.gmra.mxu0 %v752
    %v754 = vpop.f32.mrf.mxu0
    %v755 = vadd.f32 %v640, %v754
    %v756 = vand.u32 %v292, 4294901760
    %v757 = vsub.f32 %v292, %v756
    %v758 = vand.u32 %v757, 4294901760
    %759 = vmatmul.f32.gmra.mxu0 %v758
    %v760 = vpop.f32.mrf.mxu0
    %v761 = vadd.f32 %v645, %v760
    %v762 = vand.u32 %v295, 4294901760
    %v763 = vsub.f32 %v295, %v762
    %v764 = vand.u32 %v763, 4294901760
    %765 = vmatmul.f32.gmra.mxu0 %v764
    %v766 = vpop.f32.mrf.mxu0
    %v767 = vadd.f32 %v650, %v766
    %768 = vdwg.mxu0
    %769 = vmatpush.msra.mxu0 0.0
    %770 = vmatpush.msra.mxu0 0.0
    %771 = vmatpush.msra.mxu0 0.0
    %772 = vmatpush.msra.mxu0 0.0
    %773 = vmatpush.msra.mxu0 0.0
    %774 = vmatpush.msra.mxu0 0.0
    %775 = vmatpush.msra.mxu0 0.0
    %776 = vmatpush.msra.mxu0 0.0
    %777 = vmatpush.msra.mxu0 0.0
    %778 = vmatpush.msra.mxu0 0.0
    %779 = vmatpush.msra.mxu0 0.0
    %780 = vmatpush.msra.mxu0 0.0
    %v781 = vand.u32 %v247, 4294901760
    %v782 = vsub.f32 %v247, %v781
    %v783 = vand.u32 %v782, 4294901760
    %784 = vmatpush.msra.mxu0 %v783
    %v785 = vand.u32 %v246, 4294901760
    %v786 = vsub.f32 %v246, %v785
    %v787 = vand.u32 %v786, 4294901760
    %788 = vmatpush.msra.mxu0 %v787
    %v789 = vand.u32 %v245, 4294901760
    %v790 = vsub.f32 %v245, %v789
    %v791 = vand.u32 %v790, 4294901760
    %792 = vmatpush.msra.mxu0 %v791
    %v793 = vand.u32 %v244, 4294901760
    %v794 = vsub.f32 %v244, %v793
    %v795 = vand.u32 %v794, 4294901760
    %796 = vmatpush.msra.mxu0 %v795
    %v797 = vand.u32 %v250, 4294901760
    %798 = vmatmul.f32.gmra.mxu0 %v797
    %v799 = vpop.f32.mrf.mxu0
    %v800 = vadd.f32 %v677, %v799
    %v801 = vand.u32 %v253, 4294901760
    %802 = vmatmul.f32.gmra.mxu0 %v801
    %v803 = vpop.f32.mrf.mxu0
    %v804 = vadd.f32 %v683, %v803
    %v805 = vand.u32 %v256, 4294901760
    %806 = vmatmul.f32.gmra.mxu0 %v805
    %v807 = vpop.f32.mrf.mxu0
    %v808 = vadd.f32 %v689, %v807
    %v809 = vand.u32 %v259, 4294901760
    %810 = vmatmul.f32.gmra.mxu0 %v809
    %v811 = vpop.f32.mrf.mxu0
    %v812 = vadd.f32 %v695, %v811
    %v813 = vand.u32 %v262, 4294901760
    %814 = vmatmul.f32.gmra.mxu0 %v813
    %v815 = vpop.f32.mrf.mxu0
    %v816 = vadd.f32 %v701, %v815
    %v817 = vand.u32 %v265, 4294901760
    %818 = vmatmul.f32.gmra.mxu0 %v817
    %v819 = vpop.f32.mrf.mxu0
    %v820 = vadd.f32 %v707, %v819
    %v821 = vand.u32 %v268, 4294901760
    %822 = vmatmul.f32.gmra.mxu0 %v821
    %v823 = vpop.f32.mrf.mxu0
    %v824 = vadd.f32 %v713, %v823
    %v825 = vand.u32 %v271, 4294901760
    %826 = vmatmul.f32.gmra.mxu0 %v825
    %v827 = vpop.f32.mrf.mxu0
    %v828 = vadd.f32 %v719, %v827
    %v829 = vand.u32 %v274, 4294901760
    %830 = vmatmul.f32.gmra.mxu0 %v829
    %v831 = vpop.f32.mrf.mxu0
    %v832 = vadd.f32 %v725, %v831
    %v833 = vand.u32 %v277, 4294901760
    %834 = vmatmul.f32.gmra.mxu0 %v833
    %v835 = vpop.f32.mrf.mxu0
    %v836 = vadd.f32 %v731, %v835
    %v837 = vand.u32 %v280, 4294901760
    %838 = vmatmul.f32.gmra.mxu0 %v837
    %v839 = vpop.f32.mrf.mxu0
    %v840 = vadd.f32 %v737, %v839
    %v841 = vand.u32 %v283, 4294901760
    %842 = vmatmul.f32.gmra.mxu0 %v841
    %v843 = vpop.f32.mrf.mxu0
    %v844 = vadd.f32 %v743, %v843
    %v845 = vand.u32 %v286, 4294901760
    %846 = vmatmul.f32.gmra.mxu0 %v845
    %v847 = vpop.f32.mrf.mxu0
    %v848 = vadd.f32 %v749, %v847
    %v849 = vand.u32 %v289, 4294901760
    %850 = vmatmul.f32.gmra.mxu0 %v849
    %v851 = vpop.f32.mrf.mxu0
    %v852 = vadd.f32 %v755, %v851
    %v853 = vand.u32 %v292, 4294901760
    %854 = vmatmul.f32.gmra.mxu0 %v853
    %v855 = vpop.f32.mrf.mxu0
    %v856 = vadd.f32 %v761, %v855
    %v857 = vand.u32 %v295, 4294901760
    %858 = vmatmul.f32.gmra.mxu0 %v857
    %v859 = vpop.f32.mrf.mxu0
    %v860 = vadd.f32 %v767, %v859
    %861 = vdwg.mxu0
    %862 = vmatpush.msra.mxu0 0.0
    %863 = vmatpush.msra.mxu0 0.0
    %864 = vmatpush.msra.mxu0 0.0
    %865 = vmatpush.msra.mxu0 0.0
    %866 = vmatpush.msra.mxu0 0.0
    %867 = vmatpush.msra.mxu0 0.0
    %868 = vmatpush.msra.mxu0 0.0
    %869 = vmatpush.msra.mxu0 0.0
    %870 = vmatpush.msra.mxu0 0.0
    %871 = vmatpush.msra.mxu0 0.0
    %872 = vmatpush.msra.mxu0 0.0
    %873 = vmatpush.msra.mxu0 0.0
    %v874 = vand.u32 %v247, 4294901760
    %875 = vmatpush.msra.mxu0 %v874
    %v876 = vand.u32 %v246, 4294901760
    %877 = vmatpush.msra.mxu0 %v876
    %v878 = vand.u32 %v245, 4294901760
    %879 = vmatpush.msra.mxu0 %v878
    %v880 = vand.u32 %v244, 4294901760
    %881 = vmatpush.msra.mxu0 %v880
    %v882 = vand.u32 %v250, 4294901760
    %883 = vmatmul.f32.gmra.mxu0 %v882
    %v884 = vpop.f32.mrf.mxu0
    %v885 = vadd.f32 %v800, %v884
    %v886 = vand.u32 %v253, 4294901760
    %887 = vmatmul.f32.gmra.mxu0 %v886
    %v888 = vpop.f32.mrf.mxu0
    %v889 = vadd.f32 %v804, %v888
    %v890 = vand.u32 %v256, 4294901760
    %891 = vmatmul.f32.gmra.mxu0 %v890
    %v892 = vpop.f32.mrf.mxu0
    %v893 = vadd.f32 %v808, %v892
    %v894 = vand.u32 %v259, 4294901760
    %895 = vmatmul.f32.gmra.mxu0 %v894
    %v896 = vpop.f32.mrf.mxu0
    %v897 = vadd.f32 %v812, %v896
    %v898 = vand.u32 %v262, 4294901760
    %899 = vmatmul.f32.gmra.mxu0 %v898
    %v900 = vpop.f32.mrf.mxu0
    %v901 = vadd.f32 %v816, %v900
    %v902 = vand.u32 %v265, 4294901760
    %903 = vmatmul.f32.gmra.mxu0 %v902
    %v904 = vpop.f32.mrf.mxu0
    %v905 = vadd.f32 %v820, %v904
    %v906 = vand.u32 %v268, 4294901760
    %907 = vmatmul.f32.gmra.mxu0 %v906
    %v908 = vpop.f32.mrf.mxu0
    %v909 = vadd.f32 %v824, %v908
    %v910 = vand.u32 %v271, 4294901760
    %911 = vmatmul.f32.gmra.mxu0 %v910
    %v912 = vpop.f32.mrf.mxu0
    %v913 = vadd.f32 %v828, %v912
    %v914 = vand.u32 %v274, 4294901760
    %915 = vmatmul.f32.gmra.mxu0 %v914
    %v916 = vpop.f32.mrf.mxu0
    %v917 = vadd.f32 %v832, %v916
    %v918 = vand.u32 %v277, 4294901760
    %919 = vmatmul.f32.gmra.mxu0 %v918
    %v920 = vpop.f32.mrf.mxu0
    %v921 = vadd.f32 %v836, %v920
    %v922 = vand.u32 %v280, 4294901760
    %923 = vmatmul.f32.gmra.mxu0 %v922
    %v924 = vpop.f32.mrf.mxu0
    %v925 = vadd.f32 %v840, %v924
    %v926 = vand.u32 %v283, 4294901760
    %927 = vmatmul.f32.gmra.mxu0 %v926
    %v928 = vpop.f32.mrf.mxu0
    %v929 = vadd.f32 %v844, %v928
    %v930 = vand.u32 %v286, 4294901760
    %931 = vmatmul.f32.gmra.mxu0 %v930
    %v932 = vpop.f32.mrf.mxu0
    %v933 = vadd.f32 %v848, %v932
    %v934 = vand.u32 %v289, 4294901760
    %935 = vmatmul.f32.gmra.mxu0 %v934
    %v936 = vpop.f32.mrf.mxu0
    %v937 = vadd.f32 %v852, %v936
    %v938 = vand.u32 %v292, 4294901760
    %939 = vmatmul.f32.gmra.mxu0 %v938
    %v940 = vpop.f32.mrf.mxu0
    %v941 = vadd.f32 %v856, %v940
    %v942 = vand.u32 %v295, 4294901760
    %943 = vmatmul.f32.gmra.mxu0 %v942
    %v944 = vpop.f32.mrf.mxu0
    %v945 = vadd.f32 %v860, %v944
    %946 = vdwg.mxu0
    %v947 = vld [vmem:[%s3] sm:$0xff]
    %v948 = vld [vmem:[%s3 + $0x8] sm:$0xff]
    %v949 = vld [vmem:[%s3 + $0x10] sm:$0xff]
    %v950 = vld [vmem:[%s3 + $0x18] sm:$0xff]
    %v951 = vld [vmem:[%s3 + $0x20] sm:$0xff]
    %v952 = vld [vmem:[%s3 + $0x28] sm:$0xff]
    %vm953 = vcmask 392192
    %v955 = vsel %vm953, %v228, 0
    %v958 = vsel %vm953, %v229, 0
    %v961 = vsel %vm953, %v230, 0
    %v964 = vsel %vm953, %v231, 0
    %v967 = vsel %vm953, %v232, 0
    %v970 = vsel %vm953, %v233, 0
    %v973 = vsel %vm953, %v234, 0
    %v976 = vsel %vm953, %v235, 0
    %v979 = vsel %vm953, %v236, 0
    %v982 = vsel %vm953, %v237, 0
    %v985 = vsel %vm953, %v238, 0
    %v988 = vsel %vm953, %v239, 0
    %v991 = vsel %vm953, %v240, 0
    %v994 = vsel %vm953, %v241, 0
    %v997 = vsel %vm953, %v242, 0
    %v1000 = vsel %vm953, %v243, 0
    %1002 = vmatpush.msra.mxu0 0.0
    %1003 = vmatpush.msra.mxu0 0.0
    %1004 = vmatpush.msra.mxu0 0.0
    %1005 = vmatpush.msra.mxu0 0.0
    %1006 = vmatpush.msra.mxu0 0.0
    %1007 = vmatpush.msra.mxu0 0.0
    %1008 = vmatpush.msra.mxu0 0.0
    %1009 = vmatpush.msra.mxu0 0.0
    %1010 = vmatpush.msra.mxu0 0.0
    %1011 = vmatpush.msra.mxu0 0.0
    %v1012 = vand.u32 %v952, 4294901760
    %1013 = vmatpush.msra.mxu0 %v1012
    %v1014 = vand.u32 %v951, 4294901760
    %1015 = vmatpush.msra.mxu0 %v1014
    %v1016 = vand.u32 %v950, 4294901760
    %1017 = vmatpush.msra.mxu0 %v1016
    %v1018 = vand.u32 %v949, 4294901760
    %1019 = vmatpush.msra.mxu0 %v1018
    %v1020 = vand.u32 %v948, 4294901760
    %1021 = vmatpush.msra.mxu0 %v1020
    %v1022 = vand.u32 %v947, 4294901760
    %1023 = vmatpush.msra.mxu0 %v1022
    %v1024 = vand.u32 %v955, 4294901760
    %v1025 = vsub.f32 %v955, %v1024
    %v1026 = vand.u32 %v1025, 4294901760
    %v1027 = vsub.f32 %v1025, %v1026
    %v1028 = vand.u32 %v1027, 4294901760
    %1029 = vmatmul.f32.gmra.mxu0 %v1028
    %v1030 = vpop.f32.mrf.mxu0
    %v1031 = vadd.f32 0.0, %v1030
    %v1032 = vand.u32 %v958, 4294901760
    %v1033 = vsub.f32 %v958, %v1032
    %v1034 = vand.u32 %v1033, 4294901760
    %v1035 = vsub.f32 %v1033, %v1034
    %v1036 = vand.u32 %v1035, 4294901760
    %1037 = vmatmul.f32.gmra.mxu0 %v1036
    %v1038 = vpop.f32.mrf.mxu0
    %v1039 = vadd.f32 0.0, %v1038
    %v1040 = vand.u32 %v961, 4294901760
    %v1041 = vsub.f32 %v961, %v1040
    %v1042 = vand.u32 %v1041, 4294901760
    %v1043 = vsub.f32 %v1041, %v1042
    %v1044 = vand.u32 %v1043, 4294901760
    %1045 = vmatmul.f32.gmra.mxu0 %v1044
    %v1046 = vpop.f32.mrf.mxu0
    %v1047 = vadd.f32 0.0, %v1046
    %v1048 = vand.u32 %v964, 4294901760
    %v1049 = vsub.f32 %v964, %v1048
    %v1050 = vand.u32 %v1049, 4294901760
    %v1051 = vsub.f32 %v1049, %v1050
    %v1052 = vand.u32 %v1051, 4294901760
    %1053 = vmatmul.f32.gmra.mxu0 %v1052
    %v1054 = vpop.f32.mrf.mxu0
    %v1055 = vadd.f32 0.0, %v1054
    %v1056 = vand.u32 %v967, 4294901760
    %v1057 = vsub.f32 %v967, %v1056
    %v1058 = vand.u32 %v1057, 4294901760
    %v1059 = vsub.f32 %v1057, %v1058
    %v1060 = vand.u32 %v1059, 4294901760
    %1061 = vmatmul.f32.gmra.mxu0 %v1060
    %v1062 = vpop.f32.mrf.mxu0
    %v1063 = vadd.f32 0.0, %v1062
    %v1064 = vand.u32 %v970, 4294901760
    %v1065 = vsub.f32 %v970, %v1064
    %v1066 = vand.u32 %v1065, 4294901760
    %v1067 = vsub.f32 %v1065, %v1066
    %v1068 = vand.u32 %v1067, 4294901760
    %1069 = vmatmul.f32.gmra.mxu0 %v1068
    %v1070 = vpop.f32.mrf.mxu0
    %v1071 = vadd.f32 0.0, %v1070
    %v1072 = vand.u32 %v973, 4294901760
    %v1073 = vsub.f32 %v973, %v1072
    %v1074 = vand.u32 %v1073, 4294901760
    %v1075 = vsub.f32 %v1073, %v1074
    %v1076 = vand.u32 %v1075, 4294901760
    %1077 = vmatmul.f32.gmra.mxu0 %v1076
    %v1078 = vpop.f32.mrf.mxu0
    %v1079 = vadd.f32 0.0, %v1078
    %v1080 = vand.u32 %v976, 4294901760
    %v1081 = vsub.f32 %v976, %v1080
    %v1082 = vand.u32 %v1081, 4294901760
    %v1083 = vsub.f32 %v1081, %v1082
    %v1084 = vand.u32 %v1083, 4294901760
    %1085 = vmatmul.f32.gmra.mxu0 %v1084
    %v1086 = vpop.f32.mrf.mxu0
    %v1087 = vadd.f32 0.0, %v1086
    %v1088 = vand.u32 %v979, 4294901760
    %v1089 = vsub.f32 %v979, %v1088
    %v1090 = vand.u32 %v1089, 4294901760
    %v1091 = vsub.f32 %v1089, %v1090
    %v1092 = vand.u32 %v1091, 4294901760
    %1093 = vmatmul.f32.gmra.mxu0 %v1092
    %v1094 = vpop.f32.mrf.mxu0
    %v1095 = vadd.f32 0.0, %v1094
    %v1096 = vand.u32 %v982, 4294901760
    %v1097 = vsub.f32 %v982, %v1096
    %v1098 = vand.u32 %v1097, 4294901760
    %v1099 = vsub.f32 %v1097, %v1098
    %v1100 = vand.u32 %v1099, 4294901760
    %1101 = vmatmul.f32.gmra.mxu0 %v1100
    %v1102 = vpop.f32.mrf.mxu0
    %v1103 = vadd.f32 0.0, %v1102
    %v1104 = vand.u32 %v985, 4294901760
    %v1105 = vsub.f32 %v985, %v1104
    %v1106 = vand.u32 %v1105, 4294901760
    %v1107 = vsub.f32 %v1105, %v1106
    %v1108 = vand.u32 %v1107, 4294901760
    %1109 = vmatmul.f32.gmra.mxu0 %v1108
    %v1110 = vpop.f32.mrf.mxu0
    %v1111 = vadd.f32 0.0, %v1110
    %v1112 = vand.u32 %v988, 4294901760
    %v1113 = vsub.f32 %v988, %v1112
    %v1114 = vand.u32 %v1113, 4294901760
    %v1115 = vsub.f32 %v1113, %v1114
    %v1116 = vand.u32 %v1115, 4294901760
    %1117 = vmatmul.f32.gmra.mxu0 %v1116
    %v1118 = vpop.f32.mrf.mxu0
    %v1119 = vadd.f32 0.0, %v1118
    %v1120 = vand.u32 %v991, 4294901760
    %v1121 = vsub.f32 %v991, %v1120
    %v1122 = vand.u32 %v1121, 4294901760
    %v1123 = vsub.f32 %v1121, %v1122
    %v1124 = vand.u32 %v1123, 4294901760
    %1125 = vmatmul.f32.gmra.mxu0 %v1124
    %v1126 = vpop.f32.mrf.mxu0
    %v1127 = vadd.f32 0.0, %v1126
    %v1128 = vand.u32 %v994, 4294901760
    %v1129 = vsub.f32 %v994, %v1128
    %v1130 = vand.u32 %v1129, 4294901760
    %v1131 = vsub.f32 %v1129, %v1130
    %v1132 = vand.u32 %v1131, 4294901760
    %1133 = vmatmul.f32.gmra.mxu0 %v1132
    %v1134 = vpop.f32.mrf.mxu0
    %v1135 = vadd.f32 0.0, %v1134
    %v1136 = vand.u32 %v997, 4294901760
    %v1137 = vsub.f32 %v997, %v1136
    %v1138 = vand.u32 %v1137, 4294901760
    %v1139 = vsub.f32 %v1137, %v1138
    %v1140 = vand.u32 %v1139, 4294901760
    %1141 = vmatmul.f32.gmra.mxu0 %v1140
    %v1142 = vpop.f32.mrf.mxu0
    %v1143 = vadd.f32 0.0, %v1142
    %v1144 = vand.u32 %v1000, 4294901760
    %v1145 = vsub.f32 %v1000, %v1144
    %v1146 = vand.u32 %v1145, 4294901760
    %v1147 = vsub.f32 %v1145, %v1146
    %v1148 = vand.u32 %v1147, 4294901760
    %1149 = vmatmul.f32.gmra.mxu0 %v1148
    %v1150 = vpop.f32.mrf.mxu0
    %v1151 = vadd.f32 0.0, %v1150
    %1152 = vdwg.mxu0
    %1153 = vmatpush.msra.mxu0 0.0
    %1154 = vmatpush.msra.mxu0 0.0
    %1155 = vmatpush.msra.mxu0 0.0
    %1156 = vmatpush.msra.mxu0 0.0
    %1157 = vmatpush.msra.mxu0 0.0
    %1158 = vmatpush.msra.mxu0 0.0
    %1159 = vmatpush.msra.mxu0 0.0
    %1160 = vmatpush.msra.mxu0 0.0
    %1161 = vmatpush.msra.mxu0 0.0
    %1162 = vmatpush.msra.mxu0 0.0
    %v1163 = vand.u32 %v952, 4294901760
    %v1164 = vsub.f32 %v952, %v1163
    %v1165 = vand.u32 %v1164, 4294901760
    %v1166 = vsub.f32 %v1164, %v1165
    %v1167 = vand.u32 %v1166, 4294901760
    %1168 = vmatpush.msra.mxu0 %v1167
    %v1169 = vand.u32 %v951, 4294901760
    %v1170 = vsub.f32 %v951, %v1169
    %v1171 = vand.u32 %v1170, 4294901760
    %v1172 = vsub.f32 %v1170, %v1171
    %v1173 = vand.u32 %v1172, 4294901760
    %1174 = vmatpush.msra.mxu0 %v1173
    %v1175 = vand.u32 %v950, 4294901760
    %v1176 = vsub.f32 %v950, %v1175
    %v1177 = vand.u32 %v1176, 4294901760
    %v1178 = vsub.f32 %v1176, %v1177
    %v1179 = vand.u32 %v1178, 4294901760
    %1180 = vmatpush.msra.mxu0 %v1179
    %v1181 = vand.u32 %v949, 4294901760
    %v1182 = vsub.f32 %v949, %v1181
    %v1183 = vand.u32 %v1182, 4294901760
    %v1184 = vsub.f32 %v1182, %v1183
    %v1185 = vand.u32 %v1184, 4294901760
    %1186 = vmatpush.msra.mxu0 %v1185
    %v1187 = vand.u32 %v948, 4294901760
    %v1188 = vsub.f32 %v948, %v1187
    %v1189 = vand.u32 %v1188, 4294901760
    %v1190 = vsub.f32 %v1188, %v1189
    %v1191 = vand.u32 %v1190, 4294901760
    %1192 = vmatpush.msra.mxu0 %v1191
    %v1193 = vand.u32 %v947, 4294901760
    %v1194 = vsub.f32 %v947, %v1193
    %v1195 = vand.u32 %v1194, 4294901760
    %v1196 = vsub.f32 %v1194, %v1195
    %v1197 = vand.u32 %v1196, 4294901760
    %1198 = vmatpush.msra.mxu0 %v1197
    %v1199 = vand.u32 %v955, 4294901760
    %1200 = vmatmul.f32.gmra.mxu0 %v1199
    %v1201 = vpop.f32.mrf.mxu0
    %v1202 = vadd.f32 %v1031, %v1201
    %v1203 = vand.u32 %v958, 4294901760
    %1204 = vmatmul.f32.gmra.mxu0 %v1203
    %v1205 = vpop.f32.mrf.mxu0
    %v1206 = vadd.f32 %v1039, %v1205
    %v1207 = vand.u32 %v961, 4294901760
    %1208 = vmatmul.f32.gmra.mxu0 %v1207
    %v1209 = vpop.f32.mrf.mxu0
    %v1210 = vadd.f32 %v1047, %v1209
    %v1211 = vand.u32 %v964, 4294901760
    %1212 = vmatmul.f32.gmra.mxu0 %v1211
    %v1213 = vpop.f32.mrf.mxu0
    %v1214 = vadd.f32 %v1055, %v1213
    %v1215 = vand.u32 %v967, 4294901760
    %1216 = vmatmul.f32.gmra.mxu0 %v1215
    %v1217 = vpop.f32.mrf.mxu0
    %v1218 = vadd.f32 %v1063, %v1217
    %v1219 = vand.u32 %v970, 4294901760
    %1220 = vmatmul.f32.gmra.mxu0 %v1219
    %v1221 = vpop.f32.mrf.mxu0
    %v1222 = vadd.f32 %v1071, %v1221
    %v1223 = vand.u32 %v973, 4294901760
    %1224 = vmatmul.f32.gmra.mxu0 %v1223
    %v1225 = vpop.f32.mrf.mxu0
    %v1226 = vadd.f32 %v1079, %v1225
    %v1227 = vand.u32 %v976, 4294901760
    %1228 = vmatmul.f32.gmra.mxu0 %v1227
    %v1229 = vpop.f32.mrf.mxu0
    %v1230 = vadd.f32 %v1087, %v1229
    %v1231 = vand.u32 %v979, 4294901760
    %1232 = vmatmul.f32.gmra.mxu0 %v1231
    %v1233 = vpop.f32.mrf.mxu0
    %v1234 = vadd.f32 %v1095, %v1233
    %v1235 = vand.u32 %v982, 4294901760
    %1236 = vmatmul.f32.gmra.mxu0 %v1235
    %v1237 = vpop.f32.mrf.mxu0
    %v1238 = vadd.f32 %v1103, %v1237
    %v1239 = vand.u32 %v985, 4294901760
    %1240 = vmatmul.f32.gmra.mxu0 %v1239
    %v1241 = vpop.f32.mrf.mxu0
    %v1242 = vadd.f32 %v1111, %v1241
    %v1243 = vand.u32 %v988, 4294901760
    %1244 = vmatmul.f32.gmra.mxu0 %v1243
    %v1245 = vpop.f32.mrf.mxu0
    %v1246 = vadd.f32 %v1119, %v1245
    %v1247 = vand.u32 %v991, 4294901760
    %1248 = vmatmul.f32.gmra.mxu0 %v1247
    %v1249 = vpop.f32.mrf.mxu0
    %v1250 = vadd.f32 %v1127, %v1249
    %v1251 = vand.u32 %v994, 4294901760
    %1252 = vmatmul.f32.gmra.mxu0 %v1251
    %v1253 = vpop.f32.mrf.mxu0
    %v1254 = vadd.f32 %v1135, %v1253
    %v1255 = vand.u32 %v997, 4294901760
    %1256 = vmatmul.f32.gmra.mxu0 %v1255
    %v1257 = vpop.f32.mrf.mxu0
    %v1258 = vadd.f32 %v1143, %v1257
    %v1259 = vand.u32 %v1000, 4294901760
    %1260 = vmatmul.f32.gmra.mxu0 %v1259
    %v1261 = vpop.f32.mrf.mxu0
    %v1262 = vadd.f32 %v1151, %v1261
    %1263 = vdwg.mxu0
    %1264 = vmatpush.msra.mxu0 0.0
    %1265 = vmatpush.msra.mxu0 0.0
    %1266 = vmatpush.msra.mxu0 0.0
    %1267 = vmatpush.msra.mxu0 0.0
    %1268 = vmatpush.msra.mxu0 0.0
    %1269 = vmatpush.msra.mxu0 0.0
    %1270 = vmatpush.msra.mxu0 0.0
    %1271 = vmatpush.msra.mxu0 0.0
    %1272 = vmatpush.msra.mxu0 0.0
    %1273 = vmatpush.msra.mxu0 0.0
    %v1274 = vand.u32 %v952, 4294901760
    %v1275 = vsub.f32 %v952, %v1274
    %1276 = vmatpush.msra.mxu0 %v1275
    %v1277 = vand.u32 %v951, 4294901760
    %v1278 = vsub.f32 %v951, %v1277
    %1279 = vmatpush.msra.mxu0 %v1278
    %v1280 = vand.u32 %v950, 4294901760
    %v1281 = vsub.f32 %v950, %v1280
    %1282 = vmatpush.msra.mxu0 %v1281
    %v1283 = vand.u32 %v949, 4294901760
    %v1284 = vsub.f32 %v949, %v1283
    %1285 = vmatpush.msra.mxu0 %v1284
    %v1286 = vand.u32 %v948, 4294901760
    %v1287 = vsub.f32 %v948, %v1286
    %1288 = vmatpush.msra.mxu0 %v1287
    %v1289 = vand.u32 %v947, 4294901760
    %v1290 = vsub.f32 %v947, %v1289
    %1291 = vmatpush.msra.mxu0 %v1290
    %v1292 = vand.u32 %v955, 4294901760
    %v1293 = vsub.f32 %v955, %v1292
    %1294 = vmatmul.f32.gmra.mxu0 %v1293
    %v1295 = vpop.f32.mrf.mxu0
    %v1296 = vadd.f32 %v1202, %v1295
    %v1297 = vand.u32 %v958, 4294901760
    %v1298 = vsub.f32 %v958, %v1297
    %1299 = vmatmul.f32.gmra.mxu0 %v1298
    %v1300 = vpop.f32.mrf.mxu0
    %v1301 = vadd.f32 %v1206, %v1300
    %v1302 = vand.u32 %v961, 4294901760
    %v1303 = vsub.f32 %v961, %v1302
    %1304 = vmatmul.f32.gmra.mxu0 %v1303
    %v1305 = vpop.f32.mrf.mxu0
    %v1306 = vadd.f32 %v1210, %v1305
    %v1307 = vand.u32 %v964, 4294901760
    %v1308 = vsub.f32 %v964, %v1307
    %1309 = vmatmul.f32.gmra.mxu0 %v1308
    %v1310 = vpop.f32.mrf.mxu0
    %v1311 = vadd.f32 %v1214, %v1310
    %v1312 = vand.u32 %v967, 4294901760
    %v1313 = vsub.f32 %v967, %v1312
    %1314 = vmatmul.f32.gmra.mxu0 %v1313
    %v1315 = vpop.f32.mrf.mxu0
    %v1316 = vadd.f32 %v1218, %v1315
    %v1317 = vand.u32 %v970, 4294901760
    %v1318 = vsub.f32 %v970, %v1317
    %1319 = vmatmul.f32.gmra.mxu0 %v1318
    %v1320 = vpop.f32.mrf.mxu0
    %v1321 = vadd.f32 %v1222, %v1320
    %v1322 = vand.u32 %v973, 4294901760
    %v1323 = vsub.f32 %v973, %v1322
    %1324 = vmatmul.f32.gmra.mxu0 %v1323
    %v1325 = vpop.f32.mrf.mxu0
    %v1326 = vadd.f32 %v1226, %v1325
    %v1327 = vand.u32 %v976, 4294901760
    %v1328 = vsub.f32 %v976, %v1327
    %1329 = vmatmul.f32.gmra.mxu0 %v1328
    %v1330 = vpop.f32.mrf.mxu0
    %v1331 = vadd.f32 %v1230, %v1330
    %v1332 = vand.u32 %v979, 4294901760
    %v1333 = vsub.f32 %v979, %v1332
    %1334 = vmatmul.f32.gmra.mxu0 %v1333
    %v1335 = vpop.f32.mrf.mxu0
    %v1336 = vadd.f32 %v1234, %v1335
    %v1337 = vand.u32 %v982, 4294901760
    %v1338 = vsub.f32 %v982, %v1337
    %1339 = vmatmul.f32.gmra.mxu0 %v1338
    %v1340 = vpop.f32.mrf.mxu0
    %v1341 = vadd.f32 %v1238, %v1340
    %v1342 = vand.u32 %v985, 4294901760
    %v1343 = vsub.f32 %v985, %v1342
    %1344 = vmatmul.f32.gmra.mxu0 %v1343
    %v1345 = vpop.f32.mrf.mxu0
    %v1346 = vadd.f32 %v1242, %v1345
    %v1347 = vand.u32 %v988, 4294901760
    %v1348 = vsub.f32 %v988, %v1347
    %1349 = vmatmul.f32.gmra.mxu0 %v1348
    %v1350 = vpop.f32.mrf.mxu0
    %v1351 = vadd.f32 %v1246, %v1350
    %v1352 = vand.u32 %v991, 4294901760
    %v1353 = vsub.f32 %v991, %v1352
    %1354 = vmatmul.f32.gmra.mxu0 %v1353
    %v1355 = vpop.f32.mrf.mxu0
    %v1356 = vadd.f32 %v1250, %v1355
    %v1357 = vand.u32 %v994, 4294901760
    %v1358 = vsub.f32 %v994, %v1357
    %1359 = vmatmul.f32.gmra.mxu0 %v1358
    %v1360 = vpop.f32.mrf.mxu0
    %v1361 = vadd.f32 %v1254, %v1360
    %v1362 = vand.u32 %v997, 4294901760
    %v1363 = vsub.f32 %v997, %v1362
    %1364 = vmatmul.f32.gmra.mxu0 %v1363
    %v1365 = vpop.f32.mrf.mxu0
    %v1366 = vadd.f32 %v1258, %v1365
    %v1367 = vand.u32 %v1000, 4294901760
    %v1368 = vsub.f32 %v1000, %v1367
    %1369 = vmatmul.f32.gmra.mxu0 %v1368
    %v1370 = vpop.f32.mrf.mxu0
    %v1371 = vadd.f32 %v1262, %v1370
    %1372 = vdwg.mxu0
    %1373 = vmatpush.msra.mxu0 0.0
    %1374 = vmatpush.msra.mxu0 0.0
    %1375 = vmatpush.msra.mxu0 0.0
    %1376 = vmatpush.msra.mxu0 0.0
    %1377 = vmatpush.msra.mxu0 0.0
    %1378 = vmatpush.msra.mxu0 0.0
    %1379 = vmatpush.msra.mxu0 0.0
    %1380 = vmatpush.msra.mxu0 0.0
    %1381 = vmatpush.msra.mxu0 0.0
    %1382 = vmatpush.msra.mxu0 0.0
    %v1383 = vand.u32 %v952, 4294901760
    %1384 = vmatpush.msra.mxu0 %v1383
    %v1385 = vand.u32 %v951, 4294901760
    %1386 = vmatpush.msra.mxu0 %v1385
    %v1387 = vand.u32 %v950, 4294901760
    %1388 = vmatpush.msra.mxu0 %v1387
    %v1389 = vand.u32 %v949, 4294901760
    %1390 = vmatpush.msra.mxu0 %v1389
    %v1391 = vand.u32 %v948, 4294901760
    %1392 = vmatpush.msra.mxu0 %v1391
    %v1393 = vand.u32 %v947, 4294901760
    %1394 = vmatpush.msra.mxu0 %v1393
    %v1395 = vand.u32 %v955, 4294901760
    %v1396 = vsub.f32 %v955, %v1395
    %v1397 = vand.u32 %v1396, 4294901760
    %1398 = vmatmul.f32.gmra.mxu0 %v1397
    %v1399 = vpop.f32.mrf.mxu0
    %v1400 = vadd.f32 %v1296, %v1399
    %v1401 = vand.u32 %v958, 4294901760
    %v1402 = vsub.f32 %v958, %v1401
    %v1403 = vand.u32 %v1402, 4294901760
    %1404 = vmatmul.f32.gmra.mxu0 %v1403
    %v1405 = vpop.f32.mrf.mxu0
    %v1406 = vadd.f32 %v1301, %v1405
    %v1407 = vand.u32 %v961, 4294901760
    %v1408 = vsub.f32 %v961, %v1407
    %v1409 = vand.u32 %v1408, 4294901760
    %1410 = vmatmul.f32.gmra.mxu0 %v1409
    %v1411 = vpop.f32.mrf.mxu0
    %v1412 = vadd.f32 %v1306, %v1411
    %v1413 = vand.u32 %v964, 4294901760
    %v1414 = vsub.f32 %v964, %v1413
    %v1415 = vand.u32 %v1414, 4294901760
    %1416 = vmatmul.f32.gmra.mxu0 %v1415
    %v1417 = vpop.f32.mrf.mxu0
    %v1418 = vadd.f32 %v1311, %v1417
    %v1419 = vand.u32 %v967, 4294901760
    %v1420 = vsub.f32 %v967, %v1419
    %v1421 = vand.u32 %v1420, 4294901760
    %1422 = vmatmul.f32.gmra.mxu0 %v1421
    %v1423 = vpop.f32.mrf.mxu0
    %v1424 = vadd.f32 %v1316, %v1423
    %v1425 = vand.u32 %v970, 4294901760
    %v1426 = vsub.f32 %v970, %v1425
    %v1427 = vand.u32 %v1426, 4294901760
    %1428 = vmatmul.f32.gmra.mxu0 %v1427
    %v1429 = vpop.f32.mrf.mxu0
    %v1430 = vadd.f32 %v1321, %v1429
    %v1431 = vand.u32 %v973, 4294901760
    %v1432 = vsub.f32 %v973, %v1431
    %v1433 = vand.u32 %v1432, 4294901760
    %1434 = vmatmul.f32.gmra.mxu0 %v1433
    %v1435 = vpop.f32.mrf.mxu0
    %v1436 = vadd.f32 %v1326, %v1435
    %v1437 = vand.u32 %v976, 4294901760
    %v1438 = vsub.f32 %v976, %v1437
    %v1439 = vand.u32 %v1438, 4294901760
    %1440 = vmatmul.f32.gmra.mxu0 %v1439
    %v1441 = vpop.f32.mrf.mxu0
    %v1442 = vadd.f32 %v1331, %v1441
    %v1443 = vand.u32 %v979, 4294901760
    %v1444 = vsub.f32 %v979, %v1443
    %v1445 = vand.u32 %v1444, 4294901760
    %1446 = vmatmul.f32.gmra.mxu0 %v1445
    %v1447 = vpop.f32.mrf.mxu0
    %v1448 = vadd.f32 %v1336, %v1447
    %v1449 = vand.u32 %v982, 4294901760
    %v1450 = vsub.f32 %v982, %v1449
    %v1451 = vand.u32 %v1450, 4294901760
    %1452 = vmatmul.f32.gmra.mxu0 %v1451
    %v1453 = vpop.f32.mrf.mxu0
    %v1454 = vadd.f32 %v1341, %v1453
    %v1455 = vand.u32 %v985, 4294901760
    %v1456 = vsub.f32 %v985, %v1455
    %v1457 = vand.u32 %v1456, 4294901760
    %1458 = vmatmul.f32.gmra.mxu0 %v1457
    %v1459 = vpop.f32.mrf.mxu0
    %v1460 = vadd.f32 %v1346, %v1459
    %v1461 = vand.u32 %v988, 4294901760
    %v1462 = vsub.f32 %v988, %v1461
    %v1463 = vand.u32 %v1462, 4294901760
    %1464 = vmatmul.f32.gmra.mxu0 %v1463
    %v1465 = vpop.f32.mrf.mxu0
    %v1466 = vadd.f32 %v1351, %v1465
    %v1467 = vand.u32 %v991, 4294901760
    %v1468 = vsub.f32 %v991, %v1467
    %v1469 = vand.u32 %v1468, 4294901760
    %1470 = vmatmul.f32.gmra.mxu0 %v1469
    %v1471 = vpop.f32.mrf.mxu0
    %v1472 = vadd.f32 %v1356, %v1471
    %v1473 = vand.u32 %v994, 4294901760
    %v1474 = vsub.f32 %v994, %v1473
    %v1475 = vand.u32 %v1474, 4294901760
    %1476 = vmatmul.f32.gmra.mxu0 %v1475
    %v1477 = vpop.f32.mrf.mxu0
    %v1478 = vadd.f32 %v1361, %v1477
    %v1479 = vand.u32 %v997, 4294901760
    %v1480 = vsub.f32 %v997, %v1479
    %v1481 = vand.u32 %v1480, 4294901760
    %1482 = vmatmul.f32.gmra.mxu0 %v1481
    %v1483 = vpop.f32.mrf.mxu0
    %v1484 = vadd.f32 %v1366, %v1483
    %v1485 = vand.u32 %v1000, 4294901760
    %v1486 = vsub.f32 %v1000, %v1485
    %v1487 = vand.u32 %v1486, 4294901760
    %1488 = vmatmul.f32.gmra.mxu0 %v1487
    %v1489 = vpop.f32.mrf.mxu0
    %v1490 = vadd.f32 %v1371, %v1489
    %1491 = vdwg.mxu0
    %1492 = vmatpush.msra.mxu0 0.0
    %1493 = vmatpush.msra.mxu0 0.0
    %1494 = vmatpush.msra.mxu0 0.0
    %1495 = vmatpush.msra.mxu0 0.0
    %1496 = vmatpush.msra.mxu0 0.0
    %1497 = vmatpush.msra.mxu0 0.0
    %1498 = vmatpush.msra.mxu0 0.0
    %1499 = vmatpush.msra.mxu0 0.0
    %1500 = vmatpush.msra.mxu0 0.0
    %1501 = vmatpush.msra.mxu0 0.0
    %v1502 = vand.u32 %v952, 4294901760
    %v1503 = vsub.f32 %v952, %v1502
    %v1504 = vand.u32 %v1503, 4294901760
    %1505 = vmatpush.msra.mxu0 %v1504
    %v1506 = vand.u32 %v951, 4294901760
    %v1507 = vsub.f32 %v951, %v1506
    %v1508 = vand.u32 %v1507, 4294901760
    %1509 = vmatpush.msra.mxu0 %v1508
    %v1510 = vand.u32 %v950, 4294901760
    %v1511 = vsub.f32 %v950, %v1510
    %v1512 = vand.u32 %v1511, 4294901760
    %1513 = vmatpush.msra.mxu0 %v1512
    %v1514 = vand.u32 %v949, 4294901760
    %v1515 = vsub.f32 %v949, %v1514
    %v1516 = vand.u32 %v1515, 4294901760
    %1517 = vmatpush.msra.mxu0 %v1516
    %v1518 = vand.u32 %v948, 4294901760
    %v1519 = vsub.f32 %v948, %v1518
    %v1520 = vand.u32 %v1519, 4294901760
    %1521 = vmatpush.msra.mxu0 %v1520
    %v1522 = vand.u32 %v947, 4294901760
    %v1523 = vsub.f32 %v947, %v1522
    %v1524 = vand.u32 %v1523, 4294901760
    %1525 = vmatpush.msra.mxu0 %v1524
    %v1526 = vand.u32 %v955, 4294901760
    %1527 = vmatmul.f32.gmra.mxu0 %v1526
    %v1528 = vpop.f32.mrf.mxu0
    %v1529 = vadd.f32 %v1400, %v1528
    %v1530 = vand.u32 %v958, 4294901760
    %1531 = vmatmul.f32.gmra.mxu0 %v1530
    %v1532 = vpop.f32.mrf.mxu0
    %v1533 = vadd.f32 %v1406, %v1532
    %v1534 = vand.u32 %v961, 4294901760
    %1535 = vmatmul.f32.gmra.mxu0 %v1534
    %v1536 = vpop.f32.mrf.mxu0
    %v1537 = vadd.f32 %v1412, %v1536
    %v1538 = vand.u32 %v964, 4294901760
    %1539 = vmatmul.f32.gmra.mxu0 %v1538
    %v1540 = vpop.f32.mrf.mxu0
    %v1541 = vadd.f32 %v1418, %v1540
    %v1542 = vand.u32 %v967, 4294901760
    %1543 = vmatmul.f32.gmra.mxu0 %v1542
    %v1544 = vpop.f32.mrf.mxu0
    %v1545 = vadd.f32 %v1424, %v1544
    %v1546 = vand.u32 %v970, 4294901760
    %1547 = vmatmul.f32.gmra.mxu0 %v1546
    %v1548 = vpop.f32.mrf.mxu0
    %v1549 = vadd.f32 %v1430, %v1548
    %v1550 = vand.u32 %v973, 4294901760
    %1551 = vmatmul.f32.gmra.mxu0 %v1550
    %v1552 = vpop.f32.mrf.mxu0
    %v1553 = vadd.f32 %v1436, %v1552
    %v1554 = vand.u32 %v976, 4294901760
    %1555 = vmatmul.f32.gmra.mxu0 %v1554
    %v1556 = vpop.f32.mrf.mxu0
    %v1557 = vadd.f32 %v1442, %v1556
    %v1558 = vand.u32 %v979, 4294901760
    %1559 = vmatmul.f32.gmra.mxu0 %v1558
    %v1560 = vpop.f32.mrf.mxu0
    %v1561 = vadd.f32 %v1448, %v1560
    %v1562 = vand.u32 %v982, 4294901760
    %1563 = vmatmul.f32.gmra.mxu0 %v1562
    %v1564 = vpop.f32.mrf.mxu0
    %v1565 = vadd.f32 %v1454, %v1564
    %v1566 = vand.u32 %v985, 4294901760
    %1567 = vmatmul.f32.gmra.mxu0 %v1566
    %v1568 = vpop.f32.mrf.mxu0
    %v1569 = vadd.f32 %v1460, %v1568
    %v1570 = vand.u32 %v988, 4294901760
    %1571 = vmatmul.f32.gmra.mxu0 %v1570
    %v1572 = vpop.f32.mrf.mxu0
    %v1573 = vadd.f32 %v1466, %v1572
    %v1574 = vand.u32 %v991, 4294901760
    %1575 = vmatmul.f32.gmra.mxu0 %v1574
    %v1576 = vpop.f32.mrf.mxu0
    %v1577 = vadd.f32 %v1472, %v1576
    %v1578 = vand.u32 %v994, 4294901760
    %1579 = vmatmul.f32.gmra.mxu0 %v1578
    %v1580 = vpop.f32.mrf.mxu0
    %v1581 = vadd.f32 %v1478, %v1580
    %v1582 = vand.u32 %v997, 4294901760
    %1583 = vmatmul.f32.gmra.mxu0 %v1582
    %v1584 = vpop.f32.mrf.mxu0
    %v1585 = vadd.f32 %v1484, %v1584
    %v1586 = vand.u32 %v1000, 4294901760
    %1587 = vmatmul.f32.gmra.mxu0 %v1586
    %v1588 = vpop.f32.mrf.mxu0
    %v1589 = vadd.f32 %v1490, %v1588
    %1590 = vdwg.mxu0
    %1591 = vmatpush.msra.mxu0 0.0
    %1592 = vmatpush.msra.mxu0 0.0
    %1593 = vmatpush.msra.mxu0 0.0
    %1594 = vmatpush.msra.mxu0 0.0
    %1595 = vmatpush.msra.mxu0 0.0
    %1596 = vmatpush.msra.mxu0 0.0
    %1597 = vmatpush.msra.mxu0 0.0
    %1598 = vmatpush.msra.mxu0 0.0
    %1599 = vmatpush.msra.mxu0 0.0
    %1600 = vmatpush.msra.mxu0 0.0
    %v1601 = vand.u32 %v952, 4294901760
    %1602 = vmatpush.msra.mxu0 %v1601
    %v1603 = vand.u32 %v951, 4294901760
    %1604 = vmatpush.msra.mxu0 %v1603
    %v1605 = vand.u32 %v950, 4294901760
    %1606 = vmatpush.msra.mxu0 %v1605
    %v1607 = vand.u32 %v949, 4294901760
    %1608 = vmatpush.msra.mxu0 %v1607
    %v1609 = vand.u32 %v948, 4294901760
    %1610 = vmatpush.msra.mxu0 %v1609
    %v1611 = vand.u32 %v947, 4294901760
    %1612 = vmatpush.msra.mxu0 %v1611
    %v1613 = vand.u32 %v955, 4294901760
    %1614 = vmatmul.f32.gmra.mxu0 %v1613
    %v1615 = vpop.f32.mrf.mxu0
    %v1616 = vadd.f32 %v1529, %v1615
    %v1617 = vand.u32 %v958, 4294901760
    %1618 = vmatmul.f32.gmra.mxu0 %v1617
    %v1619 = vpop.f32.mrf.mxu0
    %v1620 = vadd.f32 %v1533, %v1619
    %v1621 = vand.u32 %v961, 4294901760
    %1622 = vmatmul.f32.gmra.mxu0 %v1621
    %v1623 = vpop.f32.mrf.mxu0
    %v1624 = vadd.f32 %v1537, %v1623
    %v1625 = vand.u32 %v964, 4294901760
    %1626 = vmatmul.f32.gmra.mxu0 %v1625
    %v1627 = vpop.f32.mrf.mxu0
    %v1628 = vadd.f32 %v1541, %v1627
    %v1629 = vand.u32 %v967, 4294901760
    %1630 = vmatmul.f32.gmra.mxu0 %v1629
    %v1631 = vpop.f32.mrf.mxu0
    %v1632 = vadd.f32 %v1545, %v1631
    %v1633 = vand.u32 %v970, 4294901760
    %1634 = vmatmul.f32.gmra.mxu0 %v1633
    %v1635 = vpop.f32.mrf.mxu0
    %v1636 = vadd.f32 %v1549, %v1635
    %v1637 = vand.u32 %v973, 4294901760
    %1638 = vmatmul.f32.gmra.mxu0 %v1637
    %v1639 = vpop.f32.mrf.mxu0
    %v1640 = vadd.f32 %v1553, %v1639
    %v1641 = vand.u32 %v976, 4294901760
    %1642 = vmatmul.f32.gmra.mxu0 %v1641
    %v1643 = vpop.f32.mrf.mxu0
    %v1644 = vadd.f32 %v1557, %v1643
    %v1645 = vand.u32 %v979, 4294901760
    %1646 = vmatmul.f32.gmra.mxu0 %v1645
    %v1647 = vpop.f32.mrf.mxu0
    %v1648 = vadd.f32 %v1561, %v1647
    %v1649 = vand.u32 %v982, 4294901760
    %1650 = vmatmul.f32.gmra.mxu0 %v1649
    %v1651 = vpop.f32.mrf.mxu0
    %v1652 = vadd.f32 %v1565, %v1651
    %v1653 = vand.u32 %v985, 4294901760
    %1654 = vmatmul.f32.gmra.mxu0 %v1653
    %v1655 = vpop.f32.mrf.mxu0
    %v1656 = vadd.f32 %v1569, %v1655
    %v1657 = vand.u32 %v988, 4294901760
    %1658 = vmatmul.f32.gmra.mxu0 %v1657
    %v1659 = vpop.f32.mrf.mxu0
    %v1660 = vadd.f32 %v1573, %v1659
    %v1661 = vand.u32 %v991, 4294901760
    %1662 = vmatmul.f32.gmra.mxu0 %v1661
    %v1663 = vpop.f32.mrf.mxu0
    %v1664 = vadd.f32 %v1577, %v1663
    %v1665 = vand.u32 %v994, 4294901760
    %1666 = vmatmul.f32.gmra.mxu0 %v1665
    %v1667 = vpop.f32.mrf.mxu0
    %v1668 = vadd.f32 %v1581, %v1667
    %v1669 = vand.u32 %v997, 4294901760
    %1670 = vmatmul.f32.gmra.mxu0 %v1669
    %v1671 = vpop.f32.mrf.mxu0
    %v1672 = vadd.f32 %v1585, %v1671
    %v1673 = vand.u32 %v1000, 4294901760
    %1674 = vmatmul.f32.gmra.mxu0 %v1673
    %v1675 = vpop.f32.mrf.mxu0
    %v1676 = vadd.f32 %v1589, %v1675
    %1677 = vdwg.mxu0
    %v1678 = vmul.f32 %v885, %v1616
    %v1679 = vmul.f32 %v889, %v1620
    %v1680 = vmul.f32 %v893, %v1624
    %v1681 = vmul.f32 %v897, %v1628
    %v1682 = vmul.f32 %v901, %v1632
    %v1683 = vmul.f32 %v905, %v1636
    %v1684 = vmul.f32 %v909, %v1640
    %v1685 = vmul.f32 %v913, %v1644
    %v1686 = vmul.f32 %v917, %v1648
    %v1687 = vmul.f32 %v921, %v1652
    %v1688 = vmul.f32 %v925, %v1656
    %v1689 = vmul.f32 %v929, %v1660
    %v1690 = vmul.f32 %v933, %v1664
    %v1691 = vmul.f32 %v937, %v1668
    %v1692 = vmul.f32 %v941, %v1672
    %v1693 = vmul.f32 %v945, %v1676
    %vm1694 = vcmask 31744
    %v1695 = vsel %vm1694, %v1678, 0.0
    %1696 = vadd.xlane.f32.xlu0 %v1695
    %v1697 = vpop.xlane.xlu0 %1696
    %v1698 = vsel %vm1694, %v1679, 0.0
    %1699 = vadd.xlane.f32.xlu0 %v1698
    %v1700 = vpop.xlane.xlu0 %1699
    %v1701 = vsel %vm1694, %v1680, 0.0
    %1702 = vadd.xlane.f32.xlu0 %v1701
    %v1703 = vpop.xlane.xlu0 %1702
    %v1704 = vsel %vm1694, %v1681, 0.0
    %1705 = vadd.xlane.f32.xlu0 %v1704
    %v1706 = vpop.xlane.xlu0 %1705
    %v1707 = vsel %vm1694, %v1682, 0.0
    %1708 = vadd.xlane.f32.xlu0 %v1707
    %v1709 = vpop.xlane.xlu0 %1708
    %v1710 = vsel %vm1694, %v1683, 0.0
    %1711 = vadd.xlane.f32.xlu0 %v1710
    %v1712 = vpop.xlane.xlu0 %1711
    %v1713 = vsel %vm1694, %v1684, 0.0
    %1714 = vadd.xlane.f32.xlu0 %v1713
    %v1715 = vpop.xlane.xlu0 %1714
    %v1716 = vsel %vm1694, %v1685, 0.0
    %1717 = vadd.xlane.f32.xlu0 %v1716
    %v1718 = vpop.xlane.xlu0 %1717
    %v1719 = vsel %vm1694, %v1686, 0.0
    %1720 = vadd.xlane.f32.xlu0 %v1719
    %v1721 = vpop.xlane.xlu0 %1720
    %v1722 = vsel %vm1694, %v1687, 0.0
    %1723 = vadd.xlane.f32.xlu0 %v1722
    %v1724 = vpop.xlane.xlu0 %1723
    %v1725 = vsel %vm1694, %v1688, 0.0
    %1726 = vadd.xlane.f32.xlu0 %v1725
    %v1727 = vpop.xlane.xlu0 %1726
    %v1728 = vsel %vm1694, %v1689, 0.0
    %1729 = vadd.xlane.f32.xlu0 %v1728
    %v1730 = vpop.xlane.xlu0 %1729
    %v1731 = vsel %vm1694, %v1690, 0.0
    %1732 = vadd.xlane.f32.xlu0 %v1731
    %v1733 = vpop.xlane.xlu0 %1732
    %v1734 = vsel %vm1694, %v1691, 0.0
    %1735 = vadd.xlane.f32.xlu0 %v1734
    %v1736 = vpop.xlane.xlu0 %1735
    %v1737 = vsel %vm1694, %v1692, 0.0
    %1738 = vadd.xlane.f32.xlu0 %v1737
    %v1739 = vpop.xlane.xlu0 %1738
    %v1740 = vsel %vm1694, %v1693, 0.0
    %1741 = vadd.xlane.f32.xlu0 %v1740
    %v1742 = vpop.xlane.xlu0 %1741
    %v1743 = vxor.u32 %v1697, 2147483648
    %v1744 = vxor.u32 %v1700, 2147483648
    %v1745 = vxor.u32 %v1703, 2147483648
    %v1746 = vxor.u32 %v1706, 2147483648
    %v1747 = vxor.u32 %v1709, 2147483648
    %v1748 = vxor.u32 %v1712, 2147483648
    %v1749 = vxor.u32 %v1715, 2147483648
    %v1750 = vxor.u32 %v1718, 2147483648
    %v1751 = vxor.u32 %v1721, 2147483648
    %v1752 = vxor.u32 %v1724, 2147483648
    %v1753 = vxor.u32 %v1727, 2147483648
    %v1754 = vxor.u32 %v1730, 2147483648
    %v1755 = vxor.u32 %v1733, 2147483648
    %v1756 = vxor.u32 %v1736, 2147483648
    %v1757 = vxor.u32 %v1739, 2147483648
    %v1758 = vxor.u32 %v1742, 2147483648
    %v1759 = vmul.f32 %v1743, 1.442695
    %v1760 = vpow.pop %v1759
    %v1761 = vmul.f32 %v1744, 1.442695
    %v1762 = vpow.pop %v1761
    %v1763 = vmul.f32 %v1745, 1.442695
    %v1764 = vpow.pop %v1763
    %v1765 = vmul.f32 %v1746, 1.442695
    %v1766 = vpow.pop %v1765
    %v1767 = vmul.f32 %v1747, 1.442695
    %v1768 = vpow.pop %v1767
    %v1769 = vmul.f32 %v1748, 1.442695
    %v1770 = vpow.pop %v1769
    %v1771 = vmul.f32 %v1749, 1.442695
    %v1772 = vpow.pop %v1771
    %v1773 = vmul.f32 %v1750, 1.442695
    %v1774 = vpow.pop %v1773
    %v1775 = vmul.f32 %v1751, 1.442695
    %v1776 = vpow.pop %v1775
    %v1777 = vmul.f32 %v1752, 1.442695
    %v1778 = vpow.pop %v1777
    %v1779 = vmul.f32 %v1753, 1.442695
    %v1780 = vpow.pop %v1779
    %v1781 = vmul.f32 %v1754, 1.442695
    %v1782 = vpow.pop %v1781
    %v1783 = vmul.f32 %v1755, 1.442695
    %v1784 = vpow.pop %v1783
    %v1785 = vmul.f32 %v1756, 1.442695
    %v1786 = vpow.pop %v1785
    %v1787 = vmul.f32 %v1757, 1.442695
    %v1788 = vpow.pop %v1787
    %v1789 = vmul.f32 %v1758, 1.442695
    %v1790 = vpow.pop %v1789
    %v1791 = vadd.f32 %v1760, 1.0
    %v1792 = vadd.f32 %v1762, 1.0
    %v1793 = vadd.f32 %v1764, 1.0
    %v1794 = vadd.f32 %v1766, 1.0
    %v1795 = vadd.f32 %v1768, 1.0
    %v1796 = vadd.f32 %v1770, 1.0
    %v1797 = vadd.f32 %v1772, 1.0
    %v1798 = vadd.f32 %v1774, 1.0
    %v1799 = vadd.f32 %v1776, 1.0
    %v1800 = vadd.f32 %v1778, 1.0
    %v1801 = vadd.f32 %v1780, 1.0
    %v1802 = vadd.f32 %v1782, 1.0
    %v1803 = vadd.f32 %v1784, 1.0
    %v1804 = vadd.f32 %v1786, 1.0
    %v1805 = vadd.f32 %v1788, 1.0
    %v1806 = vadd.f32 %v1790, 1.0
    %v1807 = vrcp.pop %v1791
    %v1808 = vmul.f32 %v1791, %v1807
    %v1809 = vsub.f32 1.0, %v1808
    %v1810 = vmul.f32 %v1807, %v1809
    %v1811 = vadd.f32 %v1807, %v1810
    %vm1812 = vweird.f32 %v1791
    %vm1813 = vweird.f32 %v1807
    %vm1814 = vmor %vm1812, %vm1813
    %v1815 = vsel %vm1814, %v1807, %v1811
    %v1816 = vand.u32 2147483647, %v1791
    %vm1817 = vcmp.eq.f32.partialorder %v1816, 8.507059e+37
    %v1818 = vand.u32 %v1791, 2147483648
    %v1819 = vor.u32 1.1754944e-38, %v1818
    %v1820 = vsel %vm1817, %v1819, %v1815
    %v1821 = vmul.f32 1.0, %v1820
    %v1822 = vrcp.pop %v1792
    %v1823 = vmul.f32 %v1792, %v1822
    %v1824 = vsub.f32 1.0, %v1823
    %v1825 = vmul.f32 %v1822, %v1824
    %v1826 = vadd.f32 %v1822, %v1825
    %vm1827 = vweird.f32 %v1792
    %vm1828 = vweird.f32 %v1822
    %vm1829 = vmor %vm1827, %vm1828
    %v1830 = vsel %vm1829, %v1822, %v1826
    %v1831 = vand.u32 2147483647, %v1792
    %vm1832 = vcmp.eq.f32.partialorder %v1831, 8.507059e+37
    %v1833 = vand.u32 %v1792, 2147483648
    %v1834 = vor.u32 1.1754944e-38, %v1833
    %v1835 = vsel %vm1832, %v1834, %v1830
    %v1836 = vmul.f32 1.0, %v1835
    %v1837 = vrcp.pop %v1793
    %v1838 = vmul.f32 %v1793, %v1837
    %v1839 = vsub.f32 1.0, %v1838
    %v1840 = vmul.f32 %v1837, %v1839
    %v1841 = vadd.f32 %v1837, %v1840
    %vm1842 = vweird.f32 %v1793
    %vm1843 = vweird.f32 %v1837
    %vm1844 = vmor %vm1842, %vm1843
    %v1845 = vsel %vm1844, %v1837, %v1841
    %v1846 = vand.u32 2147483647, %v1793
    %vm1847 = vcmp.eq.f32.partialorder %v1846, 8.507059e+37
    %v1848 = vand.u32 %v1793, 2147483648
    %v1849 = vor.u32 1.1754944e-38, %v1848
    %v1850 = vsel %vm1847, %v1849, %v1845
    %v1851 = vmul.f32 1.0, %v1850
    %v1852 = vrcp.pop %v1794
    %v1853 = vmul.f32 %v1794, %v1852
    %v1854 = vsub.f32 1.0, %v1853
    %v1855 = vmul.f32 %v1852, %v1854
    %v1856 = vadd.f32 %v1852, %v1855
    %vm1857 = vweird.f32 %v1794
    %vm1858 = vweird.f32 %v1852
    %vm1859 = vmor %vm1857, %vm1858
    %v1860 = vsel %vm1859, %v1852, %v1856
    %v1861 = vand.u32 2147483647, %v1794
    %vm1862 = vcmp.eq.f32.partialorder %v1861, 8.507059e+37
    %v1863 = vand.u32 %v1794, 2147483648
    %v1864 = vor.u32 1.1754944e-38, %v1863
    %v1865 = vsel %vm1862, %v1864, %v1860
    %v1866 = vmul.f32 1.0, %v1865
    %v1867 = vrcp.pop %v1795
    %v1868 = vmul.f32 %v1795, %v1867
    %v1869 = vsub.f32 1.0, %v1868
    %v1870 = vmul.f32 %v1867, %v1869
    %v1871 = vadd.f32 %v1867, %v1870
    %vm1872 = vweird.f32 %v1795
    %vm1873 = vweird.f32 %v1867
    %vm1874 = vmor %vm1872, %vm1873
    %v1875 = vsel %vm1874, %v1867, %v1871
    %v1876 = vand.u32 2147483647, %v1795
    %vm1877 = vcmp.eq.f32.partialorder %v1876, 8.507059e+37
    %v1878 = vand.u32 %v1795, 2147483648
    %v1879 = vor.u32 1.1754944e-38, %v1878
    %v1880 = vsel %vm1877, %v1879, %v1875
    %v1881 = vmul.f32 1.0, %v1880
    %v1882 = vrcp.pop %v1796
    %v1883 = vmul.f32 %v1796, %v1882
    %v1884 = vsub.f32 1.0, %v1883
    %v1885 = vmul.f32 %v1882, %v1884
    %v1886 = vadd.f32 %v1882, %v1885
    %vm1887 = vweird.f32 %v1796
    %vm1888 = vweird.f32 %v1882
    %vm1889 = vmor %vm1887, %vm1888
    %v1890 = vsel %vm1889, %v1882, %v1886
    %v1891 = vand.u32 2147483647, %v1796
    %vm1892 = vcmp.eq.f32.partialorder %v1891, 8.507059e+37
    %v1893 = vand.u32 %v1796, 2147483648
    %v1894 = vor.u32 1.1754944e-38, %v1893
    %v1895 = vsel %vm1892, %v1894, %v1890
    %v1896 = vmul.f32 1.0, %v1895
    %v1897 = vrcp.pop %v1797
    %v1898 = vmul.f32 %v1797, %v1897
    %v1899 = vsub.f32 1.0, %v1898
    %v1900 = vmul.f32 %v1897, %v1899
    %v1901 = vadd.f32 %v1897, %v1900
    %vm1902 = vweird.f32 %v1797
    %vm1903 = vweird.f32 %v1897
    %vm1904 = vmor %vm1902, %vm1903
    %v1905 = vsel %vm1904, %v1897, %v1901
    %v1906 = vand.u32 2147483647, %v1797
    %vm1907 = vcmp.eq.f32.partialorder %v1906, 8.507059e+37
    %v1908 = vand.u32 %v1797, 2147483648
    %v1909 = vor.u32 1.1754944e-38, %v1908
    %v1910 = vsel %vm1907, %v1909, %v1905
    %v1911 = vmul.f32 1.0, %v1910
    %v1912 = vrcp.pop %v1798
    %v1913 = vmul.f32 %v1798, %v1912
    %v1914 = vsub.f32 1.0, %v1913
    %v1915 = vmul.f32 %v1912, %v1914
    %v1916 = vadd.f32 %v1912, %v1915
    %vm1917 = vweird.f32 %v1798
    %vm1918 = vweird.f32 %v1912
    %vm1919 = vmor %vm1917, %vm1918
    %v1920 = vsel %vm1919, %v1912, %v1916
    %v1921 = vand.u32 2147483647, %v1798
    %vm1922 = vcmp.eq.f32.partialorder %v1921, 8.507059e+37
    %v1923 = vand.u32 %v1798, 2147483648
    %v1924 = vor.u32 1.1754944e-38, %v1923
    %v1925 = vsel %vm1922, %v1924, %v1920
    %v1926 = vmul.f32 1.0, %v1925
    %v1927 = vrcp.pop %v1799
    %v1928 = vmul.f32 %v1799, %v1927
    %v1929 = vsub.f32 1.0, %v1928
    %v1930 = vmul.f32 %v1927, %v1929
    %v1931 = vadd.f32 %v1927, %v1930
    %vm1932 = vweird.f32 %v1799
    %vm1933 = vweird.f32 %v1927
    %vm1934 = vmor %vm1932, %vm1933
    %v1935 = vsel %vm1934, %v1927, %v1931
    %v1936 = vand.u32 2147483647, %v1799
    %vm1937 = vcmp.eq.f32.partialorder %v1936, 8.507059e+37
    %v1938 = vand.u32 %v1799, 2147483648
    %v1939 = vor.u32 1.1754944e-38, %v1938
    %v1940 = vsel %vm1937, %v1939, %v1935
    %v1941 = vmul.f32 1.0, %v1940
    %v1942 = vrcp.pop %v1800
    %v1943 = vmul.f32 %v1800, %v1942
    %v1944 = vsub.f32 1.0, %v1943
    %v1945 = vmul.f32 %v1942, %v1944
    %v1946 = vadd.f32 %v1942, %v1945
    %vm1947 = vweird.f32 %v1800
    %vm1948 = vweird.f32 %v1942
    %vm1949 = vmor %vm1947, %vm1948
    %v1950 = vsel %vm1949, %v1942, %v1946
    %v1951 = vand.u32 2147483647, %v1800
    %vm1952 = vcmp.eq.f32.partialorder %v1951, 8.507059e+37
    %v1953 = vand.u32 %v1800, 2147483648
    %v1954 = vor.u32 1.1754944e-38, %v1953
    %v1955 = vsel %vm1952, %v1954, %v1950
    %v1956 = vmul.f32 1.0, %v1955
    %v1957 = vrcp.pop %v1801
    %v1958 = vmul.f32 %v1801, %v1957
    %v1959 = vsub.f32 1.0, %v1958
    %v1960 = vmul.f32 %v1957, %v1959
    %v1961 = vadd.f32 %v1957, %v1960
    %vm1962 = vweird.f32 %v1801
    %vm1963 = vweird.f32 %v1957
    %vm1964 = vmor %vm1962, %vm1963
    %v1965 = vsel %vm1964, %v1957, %v1961
    %v1966 = vand.u32 2147483647, %v1801
    %vm1967 = vcmp.eq.f32.partialorder %v1966, 8.507059e+37
    %v1968 = vand.u32 %v1801, 2147483648
    %v1969 = vor.u32 1.1754944e-38, %v1968
    %v1970 = vsel %vm1967, %v1969, %v1965
    %v1971 = vmul.f32 1.0, %v1970
    %v1972 = vrcp.pop %v1802
    %v1973 = vmul.f32 %v1802, %v1972
    %v1974 = vsub.f32 1.0, %v1973
    %v1975 = vmul.f32 %v1972, %v1974
    %v1976 = vadd.f32 %v1972, %v1975
    %vm1977 = vweird.f32 %v1802
    %vm1978 = vweird.f32 %v1972
    %vm1979 = vmor %vm1977, %vm1978
    %v1980 = vsel %vm1979, %v1972, %v1976
    %v1981 = vand.u32 2147483647, %v1802
    %vm1982 = vcmp.eq.f32.partialorder %v1981, 8.507059e+37
    %v1983 = vand.u32 %v1802, 2147483648
    %v1984 = vor.u32 1.1754944e-38, %v1983
    %v1985 = vsel %vm1982, %v1984, %v1980
    %v1986 = vmul.f32 1.0, %v1985
    %v1987 = vrcp.pop %v1803
    %v1988 = vmul.f32 %v1803, %v1987
    %v1989 = vsub.f32 1.0, %v1988
    %v1990 = vmul.f32 %v1987, %v1989
    %v1991 = vadd.f32 %v1987, %v1990
    %vm1992 = vweird.f32 %v1803
    %vm1993 = vweird.f32 %v1987
    %vm1994 = vmor %vm1992, %vm1993
    %v1995 = vsel %vm1994, %v1987, %v1991
    %v1996 = vand.u32 2147483647, %v1803
    %vm1997 = vcmp.eq.f32.partialorder %v1996, 8.507059e+37
    %v1998 = vand.u32 %v1803, 2147483648
    %v1999 = vor.u32 1.1754944e-38, %v1998
    %v2000 = vsel %vm1997, %v1999, %v1995
    %v2001 = vmul.f32 1.0, %v2000
    %v2002 = vrcp.pop %v1804
    %v2003 = vmul.f32 %v1804, %v2002
    %v2004 = vsub.f32 1.0, %v2003
    %v2005 = vmul.f32 %v2002, %v2004
    %v2006 = vadd.f32 %v2002, %v2005
    %vm2007 = vweird.f32 %v1804
    %vm2008 = vweird.f32 %v2002
    %vm2009 = vmor %vm2007, %vm2008
    %v2010 = vsel %vm2009, %v2002, %v2006
    %v2011 = vand.u32 2147483647, %v1804
    %vm2012 = vcmp.eq.f32.partialorder %v2011, 8.507059e+37
    %v2013 = vand.u32 %v1804, 2147483648
    %v2014 = vor.u32 1.1754944e-38, %v2013
    %v2015 = vsel %vm2012, %v2014, %v2010
    %v2016 = vmul.f32 1.0, %v2015
    %v2017 = vrcp.pop %v1805
    %v2018 = vmul.f32 %v1805, %v2017
    %v2019 = vsub.f32 1.0, %v2018
    %v2020 = vmul.f32 %v2017, %v2019
    %v2021 = vadd.f32 %v2017, %v2020
    %vm2022 = vweird.f32 %v1805
    %vm2023 = vweird.f32 %v2017
    %vm2024 = vmor %vm2022, %vm2023
    %v2025 = vsel %vm2024, %v2017, %v2021
    %v2026 = vand.u32 2147483647, %v1805
    %vm2027 = vcmp.eq.f32.partialorder %v2026, 8.507059e+37
    %v2028 = vand.u32 %v1805, 2147483648
    %v2029 = vor.u32 1.1754944e-38, %v2028
    %v2030 = vsel %vm2027, %v2029, %v2025
    %v2031 = vmul.f32 1.0, %v2030
    %v2032 = vrcp.pop %v1806
    %v2033 = vmul.f32 %v1806, %v2032
    %v2034 = vsub.f32 1.0, %v2033
    %v2035 = vmul.f32 %v2032, %v2034
    %v2036 = vadd.f32 %v2032, %v2035
    %vm2037 = vweird.f32 %v1806
    %vm2038 = vweird.f32 %v2032
    %vm2039 = vmor %vm2037, %vm2038
    %v2040 = vsel %vm2039, %v2032, %v2036
    %v2041 = vand.u32 2147483647, %v1806
    %vm2042 = vcmp.eq.f32.partialorder %v2041, 8.507059e+37
    %v2043 = vand.u32 %v1806, 2147483648
    %v2044 = vor.u32 1.1754944e-38, %v2043
    %v2045 = vsel %vm2042, %v2044, %v2040
    %v2046 = vmul.f32 1.0, %v2045
    %v2063 = vperm.slane %v1821, %v19
    %v2064 = vadd.s32 %v19, 4294967288
    %v2065 = vperm.slane %v1836, %v2064
    %vm2066 = vcmask 130112
    %v2067 = vsel %vm2066, %v2065, %v2063
    %v2068 = vadd.s32 %v19, 4294967280
    %v2069 = vperm.slane %v1851, %v2068
    %vm2070 = vcmask 195712
    %v2071 = vsel %vm2070, %v2069, %v2067
    %v2072 = vadd.s32 %v19, 4294967272
    %v2073 = vperm.slane %v1866, %v2072
    %vm2074 = vcmask 261312
    %v2075 = vsel %vm2074, %v2073, %v2071
    %v2076 = vadd.s32 %v19, 4294967264
    %v2077 = vperm.slane %v1881, %v2076
    %vm2078 = vcmask 326912
    %v2079 = vsel %vm2078, %v2077, %v2075
    %v2080 = vadd.s32 %v19, 4294967256
    %v2081 = vperm.slane %v1896, %v2080
    %vm2082 = vcmask 392512
    %v2083 = vsel %vm2082, %v2081, %v2079
    %v2084 = vadd.s32 %v19, 4294967248
    %v2085 = vperm.slane %v1911, %v2084
    %vm2086 = vcmask 458112
    %v2087 = vsel %vm2086, %v2085, %v2083
    %v2088 = vadd.s32 %v19, 4294967240
    %v2089 = vperm.slane %v1926, %v2088
    %vm2090 = vcmask 523712
    %v2091 = vsel %vm2090, %v2089, %v2087
    %v2092 = vadd.s32 %v19, 4294967232
    %v2093 = vperm.slane %v1941, %v2092
    %vm2094 = vcmask 589312
    %v2095 = vsel %vm2094, %v2093, %v2091
    %v2096 = vadd.s32 %v19, 4294967224
    %v2097 = vperm.slane %v1956, %v2096
    %vm2098 = vcmask 654912
    %v2099 = vsel %vm2098, %v2097, %v2095
    %v2100 = vadd.s32 %v19, 4294967216
    %v2101 = vperm.slane %v1971, %v2100
    %vm2102 = vcmask 720512
    %v2103 = vsel %vm2102, %v2101, %v2099
    %v2104 = vadd.s32 %v19, 4294967208
    %v2105 = vperm.slane %v1986, %v2104
    %vm2106 = vcmask 786112
    %v2107 = vsel %vm2106, %v2105, %v2103
    %v2108 = vadd.s32 %v19, 4294967200
    %v2109 = vperm.slane %v2001, %v2108
    %vm2110 = vcmask 851712
    %v2111 = vsel %vm2110, %v2109, %v2107
    %v2112 = vadd.s32 %v19, 4294967192
    %v2113 = vperm.slane %v2016, %v2112
    %vm2114 = vcmask 917312
    %v2115 = vsel %vm2114, %v2113, %v2111
    %v2116 = vadd.s32 %v19, 4294967184
    %v2117 = vperm.slane %v2031, %v2116
    %vm2118 = vcmask 982912
    %v2119 = vsel %vm2118, %v2117, %v2115
    %v2120 = vadd.s32 %v19, 4294967176
    %v2121 = vperm.slane %v2046, %v2120
    %vm2122 = vcmask 1048512
    %v2123 = vsel %vm2122, %v2121, %v2119
    %2125 = vst [vmem:[#allocation2] sm:$0x1] %v2123
    // Predicated region
    $region18: #{tpu_custom_call.1} parent=1 // pred_check
      _
    $region19: #{tpu_custom_call.1} parent=1 // pred_check_branch
      %2127 = sbr.rel (0) target = $region21
    $region20: #{tpu_custom_call.1} parent=1 // pred_region
      %2129 = vsyncadd [#allocation3], 0
      %s2131 = sshll.u32 [#allocation2], 4
      %s2132 = int_to_ptr.vmem [resolvable:$true] %s2131
      %s2133 = sshll.u32 %s4, 4
      %s2134 = int_to_ptr.hbm [resolvable:$true] %s2133
      %2136 = dma.vmem_to_hbm [thread:$0]  %s2132, 16, %s2134, [#allocation3]
    $region21: #{tpu_custom_call.1} parent=1 // pred_fallthru
      _
    // Predicated region
    $region22: #{tpu_custom_call.1} parent=1 // pred_check
      _
    $region23: #{tpu_custom_call.1} parent=1 // pred_check_branch
      %2138 = sbr.rel (0) target = $region25
    $region24: #{tpu_custom_call.1} parent=1 // pred_region
      %2140 = dma.done [#allocation3], 16
    $region25: #{tpu_custom_call.1} parent=1 // pred_fallthru
      _
    %2141 = vsyncpa [#allocation3], 1

</llo_original>
